<compile_context>
chip_gen: v5e
topology: v5e:2x2
jax: 0.10.0
libtpu: 0.0.40
codegen_flags: <defaults>
</compile_context>

<pallas_src>
import functools

import numpy as np
import jax
import jax.numpy as jnp
from jax import lax
from jax.experimental import pallas as pl
from jax.experimental.pallas import tpu as pltpu


def _round_up(x, m):
    return ((x + m - 1) // m) * m


# ----------------------------------------------------------------------------------
# Fused kernel: conv1+BN1+ReLU -> conv2+BN2 -> +shortcut -> ReLU for one batch tile.
# ----------------------------------------------------------------------------------
def _btt_block_kernel(x_ref, w1_ref, b1_ref, w2_ref, b2_ref, o_ref, y1_ref, *,
                      stride, ho, wo, cin, cout, tb, pr,
                      shortcut_mode, pad_lo, pad_hi):
    """
    x_ref  : [tb, s*s, Hps, Wps, cin]  spatially pre-padded, space-to-depth input
    w1_ref : [9*cin,  cout]            conv1 weight (kh,kw,cin)-major, BN1 scale folded in
    b1_ref : [1, cout]                 BN1 bias
    w2_ref : [9*cout, cout]            conv2 weight, BN2 scale folded in
    b2_ref : [1, cout]                 BN2 bias
    o_ref  : [cout, pr]                lane-dense output tile (pr = round_up(tb*ho*wo, 128))
    y1_ref : [tb, ho+2, wo+2, cout]    VMEM scratch: conv1 output zero-padded for conv2
    """
    s = stride
    r = tb * ho * wo

    # ----------------- conv1 (stride s) + folded BN1 + ReLU -----------------
    taps = []
    for kh in range(3):
        for kw in range(3):
            ph = (kh % s) * s + (kw % s)                       # space-to-depth plane
            t = x_ref[:, ph, kh // s:kh // s + ho, kw // s:kw // s + wo, :]  # [tb,ho,wo,cin]
            taps.append(t)
    p1 = jnp.concatenate(taps, axis=-1).reshape(r, 9 * cin)     # single K = 9*cin contraction
    y1 = jnp.dot(p1, w1_ref[...], preferred_element_type=jnp.float32)
    y1 = jnp.maximum(y1 + b1_ref[...], 0.0)                      # [r, cout] f32

    # Stage conv1 output in VMEM, zero-padded by 1 for conv2 (never touches HBM).
    y1_ref[...] = jnp.zeros(y1_ref.shape, y1_ref.dtype)
    y1_ref[:, 1:1 + ho, 1:1 + wo, :] = y1.reshape(tb, ho, wo, cout).astype(y1_ref.dtype)

    # ----------------- conv2 (stride 1) + folded BN2 -----------------
    taps2 = []
    for kh in range(3):
        for kw in range(3):
            taps2.append(y1_ref[:, kh:kh + ho, kw:kw + wo, :])   # [tb,ho,wo,cout]
    p2 = jnp.concatenate(taps2, axis=-1).reshape(r, 9 * cout)
    out = jnp.dot(p2, w2_ref[...], preferred_element_type=jnp.float32) + b2_ref[...]

    # ----------------- shortcut (ResNet option 'A') -----------------
    if shortcut_mode == "identity":
        sc = x_ref[:, 0, 1:1 + ho, 1:1 + wo, :].reshape(r, cout).astype(jnp.float32)
        out = out + sc
    else:
        # x[:, :, ::2, ::2] == the (odd,odd) space-to-depth plane of the padded input.
        sc = x_ref[:, s + 1, 0:ho, 0:wo, :].reshape(r, cin).astype(jnp.float32)
        pieces = []
        if pad_lo:
            pieces.append(jnp.zeros((r, pad_lo), jnp.float32))
        pieces.append(sc)
        if pad_hi:
            pieces.append(jnp.zeros((r, pad_hi), jnp.float32))
        sc_full = jnp.concatenate(pieces, axis=-1) if len(pieces) > 1 else pieces[0]
        out = out + sc_full

    out = jnp.maximum(out, 0.0)

    # ----------------- lane-dense store: [cout, r] (+ zero tail up to pr) -----------------
    out_cr = out.T.astype(o_ref.dtype)                           # [cout, r]
    if pr > r:
        out_cr = jnp.concatenate(
            [out_cr, jnp.zeros((cout, pr - r), o_ref.dtype)], axis=-1)
    o_ref[...] = out_cr


# ----------------------------------------------------------------------------------
# Host-side helpers: VMEM budget, batch-tile choice
# ----------------------------------------------------------------------------------
def _vmem_limit_bytes():
    cap = None
    try:
        info = pltpu.get_tpu_info()
        for name in ("vmem_capacity_bytes", "vmem_size_bytes", "vmem_bytes"):
            v = getattr(info, name, None)
            if v:
                cap = int(v)
                break
    except Exception:
        cap = None
    if not cap or cap <= 0:
        cap = 64 * 1024 * 1024           # conservative fallback: v7x-sized per-core VMEM
    # ~3/4 of physical, capped at 100 MiB (v5e/v6e have 128 MiB, v7x has 64 MiB).
    return min(int(cap * 3 // 4), 100 * 1024 * 1024)


def _pick_batch_tile(batch, per_elem_bytes, budget_bytes):
    tb = max(1, int(budget_bytes // max(per_elem_bytes, 1)))
    if batch >= 2:
        tb = min(tb, batch // 2)         # keep >=2 grid steps so v7x's 2 TCs both get work
    tb = max(1, min(tb, batch))
    while batch % tb:                    # largest divisor of batch <= tb (no ragged blocks)
        tb -= 1
    return tb


# ----------------------------------------------------------------------------------
# BTTBlock forward (single fused pallas_call)
# ----------------------------------------------------------------------------------
def btt_block_forward(x_nchw, params, stride, compute_dtype=jnp.float32):
    b, cin, h, w = x_nchw.shape
    w1, w2 = params['w1'], params['w2']
    s1, b1 = params['bn1']
    s2, b2 = params['bn2']
    cout, k = w1.shape[0], w1.shape[-1]
    assert k == 3, "BTTBlock uses 3x3 convs"
    s = int(stride)

    ho = (h + 2 - k) // s + 1
    wo = (w + 2 - k) // s + 1

    # Shortcut flavour (matches the torch module's option 'A').
    if s == 1 and cin == cout:
        shortcut_mode, pad_lo, pad_hi = "identity", 0, 0
    else:
        if s != 2 or cout != cin + 2 * (cout // 4):
            raise NotImplementedError("unsupported option-'A' shortcut configuration")
        shortcut_mode = "downsample"
        pad_lo = cout // 4
        pad_hi = cout - cin - pad_lo

    # ---- host-side prep (input-sized only, no 9x amplification): NHWC, pad, space-to-depth
    x_nhwc = jnp.transpose(x_nchw, (0, 2, 3, 1))
    hp = _round_up(h + 2, s)
    wp = _round_up(w + 2, s)
    x_pad = jnp.pad(x_nhwc, ((0, 0), (1, hp - h - 1), (1, wp - w - 1), (0, 0)))
    hps, wps = hp // s, wp // s
    x_s2d = x_pad.reshape(b, hps, s, wps, s, cin)
    x_s2d = jnp.transpose(x_s2d, (0, 2, 4, 1, 3, 5)).reshape(b, s * s, hps, wps, cin)
    x_s2d = x_s2d.astype(compute_dtype)

    # ---- fold BN (inference) scale into the conv weights; biases stay separate ----
    w1t = (jnp.transpose(w1, (2, 3, 1, 0)).reshape(9 * cin, cout)
           * s1[None, :]).astype(compute_dtype)
    w2t = (jnp.transpose(w2, (2, 3, 1, 0)).reshape(9 * cout, cout)
           * s2[None, :]).astype(compute_dtype)
    b1v = b1.reshape(1, cout).astype(jnp.float32)
    b2v = b2.reshape(1, cout).astype(jnp.float32)

    # ---- batch-tile size from a VMEM budget; keep grid >= 2 whenever batch >= 2 ----
    cbytes = jnp.dtype(compute_dtype).itemsize
    r1 = ho * wo
    per_elem = (2 * s * s * hps * wps * cin * cbytes              # double-buffered input tile
                + (ho + 2) * (wo + 2) * cout * cbytes             # y1 VMEM scratch
                + 9 * r1 * cin * cbytes + 9 * r1 * cout * cbytes  # in-kernel tap/patch temps
                + 4 * r1 * cout * 4                               # f32 matmul / shortcut temps
                + 2 * cout * _round_up(r1, 128) * 4)              # double-buffered output tile
    per_elem = int(per_elem * 1.5)                                # relayout headroom
    vmem_limit = _vmem_limit_bytes()
    tb = _pick_batch_tile(b, per_elem, max(vmem_limit - (8 << 20), per_elem))
    nb = b // tb

    r = tb * ho * wo
    pr = _round_up(r, 128)

    kernel = functools.partial(
        _btt_block_kernel, stride=s, ho=ho, wo=wo, cin=cin, cout=cout, tb=tb, pr=pr,
        shortcut_mode=shortcut_mode, pad_lo=pad_lo, pad_hi=pad_hi)

    out2d = pl.pallas_call(
        kernel,
        out_shape=jax.ShapeDtypeStruct((cout, nb * pr), jnp.float32),
        grid_spec=pltpu.PrefetchScalarGridSpec(
            num_scalar_prefetch=0,
            grid=(nb,),
            in_specs=[
                pl.BlockSpec((tb, s * s, hps, wps, cin), lambda i: (i, 0, 0, 0, 0)),
                pl.BlockSpec((9 * cin, cout), lambda i: (0, 0)),   # resident weights
                pl.BlockSpec((1, cout), lambda i: (0, 0)),
                pl.BlockSpec((9 * cout, cout), lambda i: (0, 0)),
                pl.BlockSpec((1, cout), lambda i: (0, 0)),
            ],
            out_specs=pl.BlockSpec((cout, pr), lambda i: (0, i)),
            scratch_shapes=[pltpu.VMEM((tb, ho + 2, wo + 2, cout), compute_dtype)],
        ),
        compiler_params=pltpu.CompilerParams(
            dimension_semantics=("parallel",),
            vmem_limit_bytes=vmem_limit,
        ),
    )(x_s2d, w1t, b1v, w2t, b2v)

    # Unpack lane-dense [cout, nb*pr] -> NCHW (output-sized layout plumbing only).
    out = out2d.reshape(cout, nb, pr)[:, :, :r].reshape(cout, nb, tb, ho, wo)
    return jnp.transpose(out, (1, 2, 0, 3, 4)).reshape(b, cout, ho, wo)


# ----------------------------------------------------------------------------------
# Weight / BN construction (BTT reconstruction), pure-JAX reference
# ----------------------------------------------------------------------------------
def make_btt_conv_weight(key, in_shape, out_shape, ranks, block_num, k):
    """Block-Term Tucker conv kernel, reconstructed to OIHW (torch conv layout)."""
    m = len(in_shape)
    assert m == 2 and len(ranks) == m + 2
    k0, k1, k2, k3, k4 = jax.random.split(key, 5)
    sd = 0.3
    cores = sd * jax.random.normal(k0, (block_num, *ranks), jnp.float32)
    u1 = sd * jax.random.normal(k1, (block_num, in_shape[0], out_shape[0], ranks[0]), jnp.float32)
    u2 = sd * jax.random.normal(k2, (block_num, in_shape[1], out_shape[1], ranks[1]), jnp.float32)
    p = sd * jax.random.normal(k3, (block_num, k, ranks[2]), jnp.float32)
    q = sd * jax.random.normal(k4, (block_num, k, ranks[3]), jnp.float32)
    wt = jnp.einsum('nabcd,nxpa,nyqb,nhc,nwd->pqxyhw', cores, u1, u2, p, q)
    cout = int(np.prod(out_shape))
    cin = int(np.prod(in_shape))
    return wt.reshape(cout, cin, k, k)  # OIHW


def make_bn_params(key, c, eps=1e-5):
    k1, k2, k3, k4 = jax.random.split(key, 4)
    gamma = 1.0 + 0.1 * jax.random.normal(k1, (c,), jnp.float32)
    beta = 0.1 * jax.random.normal(k2, (c,), jnp.float32)
    mean = 0.1 * jax.random.normal(k3, (c,), jnp.float32)
    var = 1.0 + 0.1 * jax.random.uniform(k4, (c,), jnp.float32)
    scale = gamma / jnp.sqrt(var + eps)
    bias = beta - mean * scale
    return scale, bias


def ref_forward(x, params, stride):
    def conv_bn(z, wt, sc, bb, st):
        y = lax.conv_general_dilated(z, wt, (st, st), [(1, 1), (1, 1)],
                                     dimension_numbers=('NCHW', 'OIHW', 'NCHW'))
        return y * sc[None, :, None, None] + bb[None, :, None, None]

    w1, w2 = params['w1'], params['w2']
    s1, b1 = params['bn1']
    s2, b2 = params['bn2']
    cin, cout = x.shape[1], w1.shape[0]
    out = jnp.maximum(conv_bn(x, w1, s1, b1, stride), 0.0)
    out = conv_bn(out, w2, s2, b2, 1)
    if stride != 1 or cin != cout:
        sc = jnp.pad(x[:, :, ::2, ::2], ((0, 0), (cout // 4, cout // 4), (0, 0), (0, 0)))
    else:
        sc = x
    return jnp.maximum(out + sc, 0.0)


if __name__ == "__main__":
    key = jax.random.PRNGKey(0)
    kx, kw1, kw2, kb1, kb2 = jax.random.split(key, 5)

    # BTTBlock(in_shape=[2,2], out_shape=[2,4], r=2, stride=2, option='A')
    in_shape, out_shape, r_rank, stride = [2, 2], [2, 4], 2, 2
    block_num, ksz = 2, 3
    c_in = int(np.prod(in_shape))     # 4
    c_out = int(np.prod(out_shape))   # 8
    ranks = [r_rank for _ in range(len(in_shape) + 2)]

    x = jax.random.normal(kx, (2, c_in, 16, 16), jnp.float32)  # NCHW, like the torch module

    params = {
        'w1': make_btt_conv_weight(kw1, in_shape, out_shape, ranks, block_num, ksz),
        'bn1': make_bn_params(kb1, c_out),
        'w2': make_btt_conv_weight(kw2, out_shape, out_shape, ranks, block_num, ksz),
        'bn2': make_bn_params(kb2, c_out),
    }

    out = btt_block_forward(x, params, stride)   # f32 path (bf16 available via compute_dtype)
    out = jax.block_until_ready(out)
    assert out.shape == (2, c_out, 8, 8), out.shape

    ref = ref_forward(x, params, stride)
    if not np.allclose(np.asarray(out), np.asarray(ref), atol=1e-4, rtol=1e-4):
        raise AssertionError("Pallas BTTBlock output does not match reference")

    print("KERNEL_OK")
</pallas_src>

<mosaic_0001>
module attributes {stable_mosaic.version = 11 : i64} {
  func.func @_btt_block_kernel(%arg0: i32, %arg1: memref<1x4x9x9x4xf32, #tpu.memory_space<vmem>>, %arg2: memref<36x8xf32, #tpu.memory_space<vmem>>, %arg3: memref<1x8xf32, #tpu.memory_space<vmem>>, %arg4: memref<72x8xf32, #tpu.memory_space<vmem>>, %arg5: memref<1x8xf32, #tpu.memory_space<vmem>>, %arg6: memref<8x128xf32, #tpu.memory_space<vmem>>, %arg7: memref<1x10x10x8xf32, #tpu.memory_space<vmem>>) attributes {dimension_semantics = [#tpu.dimension_semantics<parallel>], iteration_bounds = array<i64: 2>, scalar_prefetch = 0 : i64, scratch_operands = 1 : i64, tpu.core_type = #tpu.core_type<tc>, window_params = [{transform_indices = @transform_0, window_bounds = array<i64: 1, 4, 9, 9, 4>}, {pipeline_mode = #tpu.pipeline_mode<synchronous>, transform_indices = @transform_1, window_bounds = array<i64: 36, 8>}, {pipeline_mode = #tpu.pipeline_mode<synchronous>, transform_indices = @transform_2, window_bounds = array<i64: 1, 8>}, {pipeline_mode = #tpu.pipeline_mode<synchronous>, transform_indices = @transform_3, window_bounds = array<i64: 72, 8>}, {pipeline_mode = #tpu.pipeline_mode<synchronous>, transform_indices = @transform_4, window_bounds = array<i64: 1, 8>}, {transform_indices = @transform_5, window_bounds = array<i64: 8, 128>}]} {
    %c0 = arith.constant 0 : index
    %c0_0 = arith.constant 0 : index
    %c0_1 = arith.constant 0 : index
    %c0_2 = arith.constant 0 : index
    %c0_3 = arith.constant 0 : index
    %0 = vector.load %arg1[%c0, %c0_0, %c0_1, %c0_2, %c0_3] : memref<1x4x9x9x4xf32, #tpu.memory_space<vmem>>, vector<1x1x8x8x4xf32>
    %1 = vector.shape_cast %0 : vector<1x1x8x8x4xf32> to vector<1x8x8x4xf32>
    %c0_4 = arith.constant 0 : index
    %c1 = arith.constant 1 : index
    %c0_5 = arith.constant 0 : index
    %c0_6 = arith.constant 0 : index
    %c0_7 = arith.constant 0 : index
    %2 = vector.load %arg1[%c0_4, %c1, %c0_5, %c0_6, %c0_7] : memref<1x4x9x9x4xf32, #tpu.memory_space<vmem>>, vector<1x1x8x8x4xf32>
    %3 = vector.shape_cast %2 : vector<1x1x8x8x4xf32> to vector<1x8x8x4xf32>
    %c0_8 = arith.constant 0 : index
    %c0_9 = arith.constant 0 : index
    %c0_10 = arith.constant 0 : index
    %c1_11 = arith.constant 1 : index
    %c0_12 = arith.constant 0 : index
    %4 = vector.load %arg1[%c0_8, %c0_9, %c0_10, %c1_11, %c0_12] : memref<1x4x9x9x4xf32, #tpu.memory_space<vmem>>, vector<1x1x8x8x4xf32>
    %5 = vector.shape_cast %4 : vector<1x1x8x8x4xf32> to vector<1x8x8x4xf32>
    %c0_13 = arith.constant 0 : index
    %c2 = arith.constant 2 : index
    %c0_14 = arith.constant 0 : index
    %c0_15 = arith.constant 0 : index
    %c0_16 = arith.constant 0 : index
    %6 = vector.load %arg1[%c0_13, %c2, %c0_14, %c0_15, %c0_16] : memref<1x4x9x9x4xf32, #tpu.memory_space<vmem>>, vector<1x1x8x8x4xf32>
    %7 = vector.shape_cast %6 : vector<1x1x8x8x4xf32> to vector<1x8x8x4xf32>
    %c0_17 = arith.constant 0 : index
    %c3 = arith.constant 3 : index
    %c0_18 = arith.constant 0 : index
    %c0_19 = arith.constant 0 : index
    %c0_20 = arith.constant 0 : index
    %8 = vector.load %arg1[%c0_17, %c3, %c0_18, %c0_19, %c0_20] : memref<1x4x9x9x4xf32, #tpu.memory_space<vmem>>, vector<1x1x8x8x4xf32>
    %9 = vector.shape_cast %8 : vector<1x1x8x8x4xf32> to vector<1x8x8x4xf32>
    %c0_21 = arith.constant 0 : index
    %c2_22 = arith.constant 2 : index
    %c0_23 = arith.constant 0 : index
    %c1_24 = arith.constant 1 : index
    %c0_25 = arith.constant 0 : index
    %10 = vector.load %arg1[%c0_21, %c2_22, %c0_23, %c1_24, %c0_25] : memref<1x4x9x9x4xf32, #tpu.memory_space<vmem>>, vector<1x1x8x8x4xf32>
    %11 = vector.shape_cast %10 : vector<1x1x8x8x4xf32> to vector<1x8x8x4xf32>
    %c0_26 = arith.constant 0 : index
    %c0_27 = arith.constant 0 : index
    %c1_28 = arith.constant 1 : index
    %c0_29 = arith.constant 0 : index
    %c0_30 = arith.constant 0 : index
    %12 = vector.load %arg1[%c0_26, %c0_27, %c1_28, %c0_29, %c0_30] : memref<1x4x9x9x4xf32, #tpu.memory_space<vmem>>, vector<1x1x8x8x4xf32>
    %13 = vector.shape_cast %12 : vector<1x1x8x8x4xf32> to vector<1x8x8x4xf32>
    %c0_31 = arith.constant 0 : index
    %c1_32 = arith.constant 1 : index
    %c1_33 = arith.constant 1 : index
    %c0_34 = arith.constant 0 : index
    %c0_35 = arith.constant 0 : index
    %14 = vector.load %arg1[%c0_31, %c1_32, %c1_33, %c0_34, %c0_35] : memref<1x4x9x9x4xf32, #tpu.memory_space<vmem>>, vector<1x1x8x8x4xf32>
    %15 = vector.shape_cast %14 : vector<1x1x8x8x4xf32> to vector<1x8x8x4xf32>
    %c0_36 = arith.constant 0 : index
    %c0_37 = arith.constant 0 : index
    %c1_38 = arith.constant 1 : index
    %c1_39 = arith.constant 1 : index
    %c0_40 = arith.constant 0 : index
    %16 = vector.load %arg1[%c0_36, %c0_37, %c1_38, %c1_39, %c0_40] : memref<1x4x9x9x4xf32, #tpu.memory_space<vmem>>, vector<1x1x8x8x4xf32>
    %17 = vector.shape_cast %16 : vector<1x1x8x8x4xf32> to vector<1x8x8x4xf32>
    %18 = tpu.concatenate %1, %3, %5, %7, %9, %11, %13, %15, %17 in 3 : vector<1x8x8x4xf32>, vector<1x8x8x4xf32>, vector<1x8x8x4xf32>, vector<1x8x8x4xf32>, vector<1x8x8x4xf32>, vector<1x8x8x4xf32>, vector<1x8x8x4xf32>, vector<1x8x8x4xf32>, vector<1x8x8x4xf32> -> vector<1x8x8x36xf32>
    %19 = vector.shape_cast %18 : vector<1x8x8x36xf32> to vector<64x36xf32>
    %c0_41 = arith.constant 0 : index
    %c0_42 = arith.constant 0 : index
    %20 = vector.load %arg2[%c0_41, %c0_42] : memref<36x8xf32, #tpu.memory_space<vmem>>, vector<36x8xf32>
    %cst = arith.constant dense<0.000000e+00> : vector<64x8xf32>
    %21 = tpu.matmul %19, %20, %cst {dimension_numbers = #tpu.dot_dimension_numbers<[1], [0], [0], [1], [0, 0, 1, 1], [], []>} : vector<64x36xf32>, vector<36x8xf32>, vector<64x8xf32> -> vector<64x8xf32>
    %c0_43 = arith.constant 0 : index
    %c0_44 = arith.constant 0 : index
    %22 = vector.load %arg3[%c0_43, %c0_44] : memref<1x8xf32, #tpu.memory_space<vmem>>, vector<1x8xf32>
    %23 = vector.broadcast %22 : vector<1x8xf32> to vector<64x8xf32>
    %24 = arith.addf %21, %23 : vector<64x8xf32>
    %cst_45 = arith.constant 0.000000e+00 : f32
    %25 = vector.broadcast %cst_45 : f32 to vector<64x8xf32>
    %26 = arith.maximumf %24, %25 : vector<64x8xf32>
    %cst_46 = arith.constant 0.000000e+00 : f32
    %27 = vector.broadcast %cst_46 : f32 to vector<1x10x10x8xf32>
    %c0_47 = arith.constant 0 : index
    %c0_48 = arith.constant 0 : index
    %c0_49 = arith.constant 0 : index
    %c0_50 = arith.constant 0 : index
    %28 = vector.load %arg7[%c0_47, %c0_48, %c0_49, %c0_50] : memref<1x10x10x8xf32, #tpu.memory_space<vmem>>, vector<1x10x10x8xf32>
    tpu.vector_store %arg7[%c0_47, %c0_48, %c0_49, %c0_50], %27 {strides = array<i32>} : memref<1x10x10x8xf32, #tpu.memory_space<vmem>>, vector<1x10x10x8xf32>,
    %29 = vector.shape_cast %26 : vector<64x8xf32> to vector<1x8x8x8xf32>
    %c0_51 = arith.constant 0 : index
    %c1_52 = arith.constant 1 : index
    %c1_53 = arith.constant 1 : index
    %c0_54 = arith.constant 0 : index
    %30 = vector.load %arg7[%c0_51, %c1_52, %c1_53, %c0_54] : memref<1x10x10x8xf32, #tpu.memory_space<vmem>>, vector<1x8x8x8xf32>
    tpu.vector_store %arg7[%c0_51, %c1_52, %c1_53, %c0_54], %29 {strides = array<i32>} : memref<1x10x10x8xf32, #tpu.memory_space<vmem>>, vector<1x8x8x8xf32>,
    %c0_55 = arith.constant 0 : index
    %c0_56 = arith.constant 0 : index
    %c0_57 = arith.constant 0 : index
    %c0_58 = arith.constant 0 : index
    %31 = vector.load %arg7[%c0_55, %c0_56, %c0_57, %c0_58] : memref<1x10x10x8xf32, #tpu.memory_space<vmem>>, vector<1x8x8x8xf32>
    %c0_59 = arith.constant 0 : index
    %c0_60 = arith.constant 0 : index
    %c1_61 = arith.constant 1 : index
    %c0_62 = arith.constant 0 : index
    %32 = vector.load %arg7[%c0_59, %c0_60, %c1_61, %c0_62] : memref<1x10x10x8xf32, #tpu.memory_space<vmem>>, vector<1x8x8x8xf32>
    %c0_63 = arith.constant 0 : index
    %c0_64 = arith.constant 0 : index
    %c2_65 = arith.constant 2 : index
    %c0_66 = arith.constant 0 : index
    %33 = vector.load %arg7[%c0_63, %c0_64, %c2_65, %c0_66] : memref<1x10x10x8xf32, #tpu.memory_space<vmem>>, vector<1x8x8x8xf32>
    %c0_67 = arith.constant 0 : index
    %c1_68 = arith.constant 1 : index
    %c0_69 = arith.constant 0 : index
    %c0_70 = arith.constant 0 : index
    %34 = vector.load %arg7[%c0_67, %c1_68, %c0_69, %c0_70] : memref<1x10x10x8xf32, #tpu.memory_space<vmem>>, vector<1x8x8x8xf32>
    %c0_71 = arith.constant 0 : index
    %c1_72 = arith.constant 1 : index
    %c1_73 = arith.constant 1 : index
    %c0_74 = arith.constant 0 : index
    %35 = vector.load %arg7[%c0_71, %c1_72, %c1_73, %c0_74] : memref<1x10x10x8xf32, #tpu.memory_space<vmem>>, vector<1x8x8x8xf32>
    %c0_75 = arith.constant 0 : index
    %c1_76 = arith.constant 1 : index
    %c2_77 = arith.constant 2 : index
    %c0_78 = arith.constant 0 : index
    %36 = vector.load %arg7[%c0_75, %c1_76, %c2_77, %c0_78] : memref<1x10x10x8xf32, #tpu.memory_space<vmem>>, vector<1x8x8x8xf32>
    %c0_79 = arith.constant 0 : index
    %c2_80 = arith.constant 2 : index
    %c0_81 = arith.constant 0 : index
    %c0_82 = arith.constant 0 : index
    %37 = vector.load %arg7[%c0_79, %c2_80, %c0_81, %c0_82] : memref<1x10x10x8xf32, #tpu.memory_space<vmem>>, vector<1x8x8x8xf32>
    %c0_83 = arith.constant 0 : index
    %c2_84 = arith.constant 2 : index
    %c1_85 = arith.constant 1 : index
    %c0_86 = arith.constant 0 : index
    %38 = vector.load %arg7[%c0_83, %c2_84, %c1_85, %c0_86] : memref<1x10x10x8xf32, #tpu.memory_space<vmem>>, vector<1x8x8x8xf32>
    %c0_87 = arith.constant 0 : index
    %c2_88 = arith.constant 2 : index
    %c2_89 = arith.constant 2 : index
    %c0_90 = arith.constant 0 : index
    %39 = vector.load %arg7[%c0_87, %c2_88, %c2_89, %c0_90] : memref<1x10x10x8xf32, #tpu.memory_space<vmem>>, vector<1x8x8x8xf32>
    %40 = tpu.concatenate %31, %32, %33, %34, %35, %36, %37, %38, %39 in 3 : vector<1x8x8x8xf32>, vector<1x8x8x8xf32>, vector<1x8x8x8xf32>, vector<1x8x8x8xf32>, vector<1x8x8x8xf32>, vector<1x8x8x8xf32>, vector<1x8x8x8xf32>, vector<1x8x8x8xf32>, vector<1x8x8x8xf32> -> vector<1x8x8x72xf32>
    %41 = vector.shape_cast %40 : vector<1x8x8x72xf32> to vector<64x72xf32>
    %c0_91 = arith.constant 0 : index
    %c0_92 = arith.constant 0 : index
    %42 = vector.load %arg4[%c0_91, %c0_92] : memref<72x8xf32, #tpu.memory_space<vmem>>, vector<72x8xf32>
    %cst_93 = arith.constant dense<0.000000e+00> : vector<64x8xf32>
    %43 = tpu.matmul %41, %42, %cst_93 {dimension_numbers = #tpu.dot_dimension_numbers<[1], [0], [0], [1], [0, 0, 1, 1], [], []>} : vector<64x72xf32>, vector<72x8xf32>, vector<64x8xf32> -> vector<64x8xf32>
    %c0_94 = arith.constant 0 : index
    %c0_95 = arith.constant 0 : index
    %44 = vector.load %arg5[%c0_94, %c0_95] : memref<1x8xf32, #tpu.memory_space<vmem>>, vector<1x8xf32>
    %45 = vector.broadcast %44 : vector<1x8xf32> to vector<64x8xf32>
    %46 = arith.addf %43, %45 : vector<64x8xf32>
    %c0_96 = arith.constant 0 : index
    %c3_97 = arith.constant 3 : index
    %c0_98 = arith.constant 0 : index
    %c0_99 = arith.constant 0 : index
    %c0_100 = arith.constant 0 : index
    %47 = vector.load %arg1[%c0_96, %c3_97, %c0_98, %c0_99, %c0_100] : memref<1x4x9x9x4xf32, #tpu.memory_space<vmem>>, vector<1x1x8x8x4xf32>
    %48 = vector.shape_cast %47 : vector<1x1x8x8x4xf32> to vector<1x8x8x4xf32>
    %49 = vector.shape_cast %48 : vector<1x8x8x4xf32> to vector<64x4xf32>
    %cst_101 = arith.constant 0.000000e+00 : f32
    %50 = vector.broadcast %cst_101 : f32 to vector<64x2xf32>
    %cst_102 = arith.constant 0.000000e+00 : f32
    %51 = vector.broadcast %cst_102 : f32 to vector<64x2xf32>
    %52 = tpu.concatenate %50, %49, %51 in 1 : vector<64x2xf32>, vector<64x4xf32>, vector<64x2xf32> -> vector<64x8xf32>
    %53 = arith.addf %46, %52 : vector<64x8xf32>
    %cst_103 = arith.constant 0.000000e+00 : f32
    %54 = vector.broadcast %cst_103 : f32 to vector<64x8xf32>
    %55 = arith.maximumf %53, %54 : vector<64x8xf32>
    %56 = tpu.transpose %55, [1, 0] : vector<64x8xf32> -> vector<8x64xf32>
    %cst_104 = arith.constant 0.000000e+00 : f32
    %57 = vector.broadcast %cst_104 : f32 to vector<8x64xf32>
    %58 = tpu.concatenate %56, %57 in 1 : vector<8x64xf32>, vector<8x64xf32> -> vector<8x128xf32>
    %c0_105 = arith.constant 0 : index
    %c0_106 = arith.constant 0 : index
    %59 = vector.load %arg6[%c0_105, %c0_106] : memref<8x128xf32, #tpu.memory_space<vmem>>, vector<8x128xf32>
    tpu.vector_store %arg6[%c0_105, %c0_106], %58 {strides = array<i32>} : memref<8x128xf32, #tpu.memory_space<vmem>>, vector<8x128xf32>,
    return
  }
  func.func @transform_0(%arg0: i32) -> (i32, i32, i32, i32, i32) {
    %c0_i32 = arith.constant 0 : i32
    %c0_i32_0 = arith.constant 0 : i32
    %c0_i32_1 = arith.constant 0 : i32
    %c0_i32_2 = arith.constant 0 : i32
    %c0_i32_3 = arith.constant 0 : i32
    return %arg0, %c0_i32, %c0_i32_0, %c0_i32_1, %c0_i32_2 : i32, i32, i32, i32, i32
  }
  func.func @transform_1(%arg0: i32) -> (i32, i32) {
    %c0_i32 = arith.constant 0 : i32
    %c0_i32_0 = arith.constant 0 : i32
    %c0_i32_1 = arith.constant 0 : i32
    return %c0_i32, %c0_i32_0 : i32, i32
  }
  func.func @transform_2(%arg0: i32) -> (i32, i32) {
    %c0_i32 = arith.constant 0 : i32
    %c0_i32_0 = arith.constant 0 : i32
    %c0_i32_1 = arith.constant 0 : i32
    return %c0_i32, %c0_i32_0 : i32, i32
  }
  func.func @transform_3(%arg0: i32) -> (i32, i32) {
    %c0_i32 = arith.constant 0 : i32
    %c0_i32_0 = arith.constant 0 : i32
    %c0_i32_1 = arith.constant 0 : i32
    return %c0_i32, %c0_i32_0 : i32, i32
  }
  func.func @transform_4(%arg0: i32) -> (i32, i32) {
    %c0_i32 = arith.constant 0 : i32
    %c0_i32_0 = arith.constant 0 : i32
    %c0_i32_1 = arith.constant 0 : i32
    return %c0_i32, %c0_i32_0 : i32, i32
  }
  func.func @transform_5(%arg0: i32) -> (i32, i32) {
    %c0_i32 = arith.constant 0 : i32
    %c0_i32_0 = arith.constant 0 : i32
    return %c0_i32, %arg0 : i32, i32
  }
}

</mosaic_0001>

<llo_original>
// kernel: tpu_custom_call.1
$region0: #{tpu_custom_call.1}
  #allocation0 [shape = 'u32[]', space=smem, size = 0x4, offset = 0x4, fixed_abs, tag = 'smem constant byte address 0x4 - core index']
  #allocation1 [shape = 'u32[72,128]{1,0:T(1,128)}', space=vmem, size = 0x9000, scoped, tag = 'internal scratch']
  #allocation2 [shape = 'f32[1,10,10,8]{3,2,1,0:T(8,128)}', space=vmem, size = 0x14000, scoped, tag = 'scratch operand']
  %s0 = inlined_call_operand.vmem [shape: f32[2,4,9,9,4], index: 0, kind: input, shape index: {}]
  %s1 = inlined_call_operand.vmem [shape: f32[36,8], index: 1, kind: input, shape index: {}]
  %s2 = inlined_call_operand.vmem [shape: f32[1,8], index: 2, kind: input, shape index: {}]
  %s3 = inlined_call_operand.vmem [shape: f32[72,8], index: 3, kind: input, shape index: {}]
  %s4 = inlined_call_operand.vmem [shape: f32[1,8], index: 4, kind: input, shape index: {}]
  %s5 = inlined_call_operand.hbm [shape: f32[8,256], index: 5, kind: output, shape index: {}]
  %s6 = sld [smem:[#allocation0]]
  $region53: #{tpu_custom_call.1} parent=0
    _
  %s8 = ssub.s32 1, %s6
  %s9 = scalar_select 0, %s8, %s6
  $region1: #{tpu_custom_call.1} parent=0
    #allocation3 [shape = 'u8[8192]{0}', space=vmem, size = 0x2000, scoped, tag = 'output window, operand 0']
    #allocation4 [shape = 's32[2]{0}', space=sflag, size = 0x8, scoped, tag = 'scoped memory for tpu_custom_call.1']
    %10 = vsyncpa [#allocation4], 0
    %s11 = scalar_lea.sflag [#allocation4], 1
    %12 = vsyncpa %s11, 0
    loop: start=0, step=1, limit=4
    $region2: #{tpu_custom_call.1} parent=1 // loop_pre_header
      _
    $region3: #{tpu_custom_call.1} parent=1 // loop_header
      %s14 = sphi 0, %s18
      %p15 = scmp.ge.s32.totalorder %s14, 4
      %s24 = sphi 0, %s26
      %s27 = sphi 0, %s24
      %s28 = sphi 0, %s27
      %s44 = sphi 0, %s28
      %s48 = sphi 0, %s48
      %s50 = sphi 0, %s48
      %s51 = sphi 0, %s50
      %s65 = sphi 0, %s51
      %s69 = sphi 0, %s69
      %s71 = sphi 0, %s69
      %s72 = sphi 0, %s71
      %s86 = sphi 0, %s72
      %s90 = sphi 0, %s90
      %s92 = sphi 0, %s90
      %s93 = sphi 0, %s92
      %s107 = sphi 0, %s93
      %s111 = sphi 0, %s111
      %s113 = sphi 0, %s111
      %s114 = sphi 0, %s113
      %s128 = sphi 0, %s114
      %s134 = sphi 0, %s136
      %s137 = sphi 0, %s134
      %s138 = sphi 0, %s137
      %s154 = sphi 0, %s138
    $region4: #{tpu_custom_call.1} parent=1 // loop_header_branch
      %17 = sbr.rel (%p15) target = $region8
    $region5: #{tpu_custom_call.1} parent=1 // loop_body
      %s19 = ssub.s32 %s14, 1
      %s20 = ssub.s32 %s14, 2
      %s21 = sadd.s32 %s14, 1
      %s22 = ssub.s32 %s14, %s21
      %p23 = scmp.eq.s32.totalorder %s22, 0
      %s25 = sadd.s32 %s24, 1
      %s26 = scalar_select %p23, %s24, %s25
      %p29 = pneg %p23
      %p30 = scmp.eq.s32.totalorder %s14, 1
      %p31 = por %p29, %p30
      %p32 = scmp.ne.s32.totalorder %s24, %s27
      %p33 = scmp.eq.s32.totalorder %s14, 0
      %p34 = por %p32, %p33
      %p35 = scmp.ne.s32.totalorder %s24, %s27
      %p36 = scmp.eq.s32.totalorder %s19, 1
      %p37 = por %p35, %p36
      %p38 = scmp.ne.s32.totalorder %s27, %s28
      %p39 = scmp.eq.s32.totalorder %s19, 0
      %p40 = por %p38, %p39
      %p41 = scmp.ne.s32.totalorder %s27, %s28
      %p42 = scmp.eq.s32.totalorder %s20, 1
      %p43 = por %p41, %p42
      %p45 = scmp.ne.s32.totalorder %s28, %s44
      %p46 = scmp.eq.s32.totalorder %s20, 0
      %p47 = por %p45, %p46
      %s49 = sadd.s32 %s48, 1
      %p52 = scmp.eq.s32.totalorder %s14, 1
      %p53 = scmp.ne.s32.totalorder %s48, %s50
      %p54 = scmp.eq.s32.totalorder %s14, 0
      %p55 = por %p53, %p54
      %p56 = scmp.ne.s32.totalorder %s48, %s50
      %p57 = scmp.eq.s32.totalorder %s19, 1
      %p58 = por %p56, %p57
      %p59 = scmp.ne.s32.totalorder %s50, %s51
      %p60 = scmp.eq.s32.totalorder %s19, 0
      %p61 = por %p59, %p60
      %p62 = scmp.ne.s32.totalorder %s50, %s51
      %p63 = scmp.eq.s32.totalorder %s20, 1
      %p64 = por %p62, %p63
      %p66 = scmp.ne.s32.totalorder %s51, %s65
      %p67 = scmp.eq.s32.totalorder %s20, 0
      %p68 = por %p66, %p67
      %s70 = sadd.s32 %s69, 1
      %p73 = scmp.eq.s32.totalorder %s14, 1
      %p74 = scmp.ne.s32.totalorder %s69, %s71
      %p75 = scmp.eq.s32.totalorder %s14, 0
      %p76 = por %p74, %p75
      %p77 = scmp.ne.s32.totalorder %s69, %s71
      %p78 = scmp.eq.s32.totalorder %s19, 1
      %p79 = por %p77, %p78
      %p80 = scmp.ne.s32.totalorder %s71, %s72
      %p81 = scmp.eq.s32.totalorder %s19, 0
      %p82 = por %p80, %p81
      %p83 = scmp.ne.s32.totalorder %s71, %s72
      %p84 = scmp.eq.s32.totalorder %s20, 1
      %p85 = por %p83, %p84
      %p87 = scmp.ne.s32.totalorder %s72, %s86
      %p88 = scmp.eq.s32.totalorder %s20, 0
      %p89 = por %p87, %p88
      %s91 = sadd.s32 %s90, 1
      %p94 = scmp.eq.s32.totalorder %s14, 1
      %p95 = scmp.ne.s32.totalorder %s90, %s92
      %p96 = scmp.eq.s32.totalorder %s14, 0
      %p97 = por %p95, %p96
      %p98 = scmp.ne.s32.totalorder %s90, %s92
      %p99 = scmp.eq.s32.totalorder %s19, 1
      %p100 = por %p98, %p99
      %p101 = scmp.ne.s32.totalorder %s92, %s93
      %p102 = scmp.eq.s32.totalorder %s19, 0
      %p103 = por %p101, %p102
      %p104 = scmp.ne.s32.totalorder %s92, %s93
      %p105 = scmp.eq.s32.totalorder %s20, 1
      %p106 = por %p104, %p105
      %p108 = scmp.ne.s32.totalorder %s93, %s107
      %p109 = scmp.eq.s32.totalorder %s20, 0
      %p110 = por %p108, %p109
      %s112 = sadd.s32 %s111, 1
      %p115 = scmp.eq.s32.totalorder %s14, 1
      %p116 = scmp.ne.s32.totalorder %s111, %s113
      %p117 = scmp.eq.s32.totalorder %s14, 0
      %p118 = por %p116, %p117
      %p119 = scmp.ne.s32.totalorder %s111, %s113
      %p120 = scmp.eq.s32.totalorder %s19, 1
      %p121 = por %p119, %p120
      %p122 = scmp.ne.s32.totalorder %s113, %s114
      %p123 = scmp.eq.s32.totalorder %s19, 0
      %p124 = por %p122, %p123
      %p125 = scmp.ne.s32.totalorder %s113, %s114
      %p126 = scmp.eq.s32.totalorder %s20, 1
      %p127 = por %p125, %p126
      %p129 = scmp.ne.s32.totalorder %s114, %s128
      %p130 = scmp.eq.s32.totalorder %s20, 0
      %p131 = por %p129, %p130
      %s132 = ssub.s32 %s14, %s21
      %p133 = scmp.eq.s32.totalorder %s132, 0
      %s135 = sadd.s32 %s134, 1
      %s136 = scalar_select %p133, %s134, %s135
      %p139 = pneg %p133
      %p140 = scmp.eq.s32.totalorder %s14, 1
      %p141 = por %p139, %p140
      %p142 = scmp.ne.s32.totalorder %s134, %s137
      %p143 = scmp.eq.s32.totalorder %s14, 0
      %p144 = por %p142, %p143
      %p145 = scmp.ne.s32.totalorder %s134, %s137
      %p146 = scmp.eq.s32.totalorder %s19, 1
      %p147 = por %p145, %p146
      %p148 = scmp.ne.s32.totalorder %s137, %s138
      %p149 = scmp.eq.s32.totalorder %s19, 0
      %p150 = por %p148, %p149
      %p151 = scmp.ne.s32.totalorder %s137, %s138
      %p152 = scmp.eq.s32.totalorder %s20, 1
      %p153 = por %p151, %p152
      %p155 = scmp.ne.s32.totalorder %s138, %s154
      %p156 = scmp.eq.s32.totalorder %s20, 0
      %p157 = por %p155, %p156
      %p158 = scmp.le.s32.totalorder 1, %s14
      %p159 = scmp.lt.s32.totalorder %s14, 3
      %p160 = pnand %p158, %p159
      %p161 = pneg %p160
      // Predicated region
      $region9: #{tpu_custom_call.1} parent=5 // pred_check
        _
      $region10: #{tpu_custom_call.1} parent=5 // pred_check_branch
        %163 = sbr.rel (%p160) target = $region12
      $region11: #{tpu_custom_call.1} parent=5 // pred_region
        %s164 = ssub.s32 %s14, 1
        // Predicated region
        $region13: #{tpu_custom_call.1} parent=11 // pred_check
          %p165 = pneg %p61
        $region14: #{tpu_custom_call.1} parent=11 // pred_check_branch
          %167 = sbr.rel (%p165) target = $region16
        $region15: #{tpu_custom_call.1} parent=11 // pred_region
          _
        $region16: #{tpu_custom_call.1} parent=11 // pred_fallthru
          _
        // Predicated region
        $region17: #{tpu_custom_call.1} parent=11 // pred_check
          %p168 = pneg %p82
        $region18: #{tpu_custom_call.1} parent=11 // pred_check_branch
          %170 = sbr.rel (%p168) target = $region20
        $region19: #{tpu_custom_call.1} parent=11 // pred_region
          _
        $region20: #{tpu_custom_call.1} parent=11 // pred_fallthru
          _
        // Predicated region
        $region21: #{tpu_custom_call.1} parent=11 // pred_check
          %p171 = pneg %p103
        $region22: #{tpu_custom_call.1} parent=11 // pred_check_branch
          %173 = sbr.rel (%p171) target = $region24
        $region23: #{tpu_custom_call.1} parent=11 // pred_region
          _
        $region24: #{tpu_custom_call.1} parent=11 // pred_fallthru
          _
        // Predicated region
        $region25: #{tpu_custom_call.1} parent=11 // pred_check
          %p174 = pneg %p124
        $region26: #{tpu_custom_call.1} parent=11 // pred_check_branch
          %176 = sbr.rel (%p174) target = $region28
        $region27: #{tpu_custom_call.1} parent=11 // pred_region
          _
        $region28: #{tpu_custom_call.1} parent=11 // pred_fallthru
          _
      $region12: #{tpu_custom_call.1} parent=5 // pred_fallthru
        _
      %p177 = scmp.lt.s32.totalorder %s14, 2
      // Predicated region
      $region29: #{tpu_custom_call.1} parent=5 // pred_check
        %p178 = pneg %p177
      $region30: #{tpu_custom_call.1} parent=5 // pred_check_branch
        %180 = sbr.rel (%p178) target = $region32
      $region31: #{tpu_custom_call.1} parent=5 // pred_region
        // Predicated region
        $region33: #{tpu_custom_call.1} parent=31 // pred_check
          %p181 = pneg %p34
        $region34: #{tpu_custom_call.1} parent=31 // pred_check_branch
          %183 = sbr.rel (%p181) target = $region36
        $region35: #{tpu_custom_call.1} parent=31 // pred_region
          %p184 = scmp.lt.s32.totalorder %s14, 1
          %s185 = scalar_select %p184, %s14, 1
          %s186 = smul.addr %s185, 72
          %s187 = smul.addr %s186, 8
          %s188 = scalar_lea.vmem %s0, %s187
        $region36: #{tpu_custom_call.1} parent=31 // pred_fallthru
          _
      $region32: #{tpu_custom_call.1} parent=5 // pred_fallthru
        _
      %p189 = scmp.le.s32.totalorder 1, %s14
      %p190 = scmp.lt.s32.totalorder %s14, 3
      %p191 = pnand %p189, %p190
      %p192 = pneg %p191
      // Predicated region
      $region37: #{tpu_custom_call.1} parent=5 // pred_check
        _
      $region38: #{tpu_custom_call.1} parent=5 // pred_check_branch
        %194 = sbr.rel (%p191) target = $region40
      $region39: #{tpu_custom_call.1} parent=5 // pred_region
        %s195 = ssub.s32 %s14, 1
        %p196 = scmp.lt.s32.totalorder %s19, 1
        %s197 = scalar_select %p196, %s19, 1
        %s198 = smul.addr %s197, 72
        %s199 = smul.addr %s198, 8
        %s200 = scalar_lea.vmem %s0, %s199
        %p201 = pneg %p40
        %p202 = pneg %p37
        %p203 = pneg %p61
        %p204 = pneg %p58
        %p205 = pneg %p82
        %p206 = pneg %p79
        %p207 = pneg %p103
        %p208 = pneg %p100
        %p209 = pneg %p124
        %p210 = pneg %p121
        %p211 = pneg %p150
        %p212 = pneg %p147
        %s213 = sand.u32 %s137, 1
        %s214 = scalar_lea.sflag [#allocation4], %s213
        %s215 = sand.u32 %s137, 1
        %s216 = smul.addr %s215, 8
        %s217 = scalar_lea.vmem [#allocation3], %s216
        %p218 = scmp.lt.s32.totalorder %s19, 1
        %s219 = scalar_select %p218, %s19, 1
        %s220 = smul.addr %s219, 72
        %s221 = smul.addr %s220, 8
        %s222 = scalar_lea.vmem %s0, %s221
        %v223 = vld [vmem:[%s222] sm:$0xff]
        %v224 = vld [vmem:[%s222 + $0x10] sm:$0xff]
        %v225 = vld [vmem:[%s222 + $0x20] sm:$0xff]
        %v226 = vld [vmem:[%s222 + $0x30] sm:$0xff]
        %v227 = vld [vmem:[%s222 + $0x40] sm:$0xff]
        %v228 = vld [vmem:[%s222 + $0x50] sm:$0xff]
        %v229 = vld [vmem:[%s222 + $0x60] sm:$0xff]
        %v230 = vld [vmem:[%s222 + $0x70] sm:$0xff]
        %s231 = scalar_lea.vmem %s222, 144
        %v232 = vld [vmem:[%s231] sm:$0xff]
        %v233 = vld [vmem:[%s231 + $0x10] sm:$0xff]
        %v234 = vld [vmem:[%s231 + $0x20] sm:$0xff]
        %v235 = vld [vmem:[%s231 + $0x30] sm:$0xff]
        %v236 = vld [vmem:[%s231 + $0x40] sm:$0xff]
        %v237 = vld [vmem:[%s231 + $0x50] sm:$0xff]
        %v238 = vld [vmem:[%s231 + $0x60] sm:$0xff]
        %v239 = vld [vmem:[%s231 + $0x70] sm:$0xff]
        %v240 = vld [vmem:[%s222 + $0x1] sm:$0xff]
        %v241 = vld [vmem:[%s222 + $0x11] sm:$0xff]
        %v242 = vld [vmem:[%s222 + $0x21] sm:$0xff]
        %v243 = vld [vmem:[%s222 + $0x31] sm:$0xff]
        %v244 = vld [vmem:[%s222 + $0x41] sm:$0xff]
        %v245 = vld [vmem:[%s222 + $0x51] sm:$0xff]
        %v246 = vld [vmem:[%s222 + $0x61] sm:$0xff]
        %v247 = vld [vmem:[%s222 + $0x71] sm:$0xff]
        %s248 = scalar_lea.vmem %s222, 288
        %v249 = vld [vmem:[%s248] sm:$0xff]
        %v250 = vld [vmem:[%s248 + $0x10] sm:$0xff]
        %v251 = vld [vmem:[%s248 + $0x20] sm:$0xff]
        %v252 = vld [vmem:[%s248 + $0x30] sm:$0xff]
        %v253 = vld [vmem:[%s248 + $0x40] sm:$0xff]
        %v254 = vld [vmem:[%s248 + $0x50] sm:$0xff]
        %v255 = vld [vmem:[%s248 + $0x60] sm:$0xff]
        %v256 = vld [vmem:[%s248 + $0x70] sm:$0xff]
        %s257 = scalar_lea.vmem %s222, 432
        %v258 = vld [vmem:[%s257] sm:$0xff]
        %v259 = vld [vmem:[%s257 + $0x10] sm:$0xff]
        %v260 = vld [vmem:[%s257 + $0x20] sm:$0xff]
        %v261 = vld [vmem:[%s257 + $0x30] sm:$0xff]
        %v262 = vld [vmem:[%s257 + $0x40] sm:$0xff]
        %v263 = vld [vmem:[%s257 + $0x50] sm:$0xff]
        %v264 = vld [vmem:[%s257 + $0x60] sm:$0xff]
        %v265 = vld [vmem:[%s257 + $0x70] sm:$0xff]
        %v266 = vld [vmem:[%s248 + $0x1] sm:$0xff]
        %v267 = vld [vmem:[%s248 + $0x11] sm:$0xff]
        %v268 = vld [vmem:[%s248 + $0x21] sm:$0xff]
        %v269 = vld [vmem:[%s248 + $0x31] sm:$0xff]
        %v270 = vld [vmem:[%s248 + $0x41] sm:$0xff]
        %v271 = vld [vmem:[%s248 + $0x51] sm:$0xff]
        %v272 = vld [vmem:[%s248 + $0x61] sm:$0xff]
        %v273 = vld [vmem:[%s248 + $0x71] sm:$0xff]
        %s274 = scalar_lea.vmem %s222, 16
        %v275 = vld [vmem:[%s274] sm:$0xff]
        %v276 = vld [vmem:[%s274 + $0x10] sm:$0xff]
        %v277 = vld [vmem:[%s274 + $0x20] sm:$0xff]
        %v278 = vld [vmem:[%s274 + $0x30] sm:$0xff]
        %v279 = vld [vmem:[%s274 + $0x40] sm:$0xff]
        %v280 = vld [vmem:[%s274 + $0x50] sm:$0xff]
        %v281 = vld [vmem:[%s274 + $0x60] sm:$0xff]
        %v282 = vld [vmem:[%s274 + $0x70] sm:$0xff]
        %s283 = scalar_lea.vmem %s222, 160
        %v284 = vld [vmem:[%s283] sm:$0xff]
        %v285 = vld [vmem:[%s283 + $0x10] sm:$0xff]
        %v286 = vld [vmem:[%s283 + $0x20] sm:$0xff]
        %v287 = vld [vmem:[%s283 + $0x30] sm:$0xff]
        %v288 = vld [vmem:[%s283 + $0x40] sm:$0xff]
        %v289 = vld [vmem:[%s283 + $0x50] sm:$0xff]
        %v290 = vld [vmem:[%s283 + $0x60] sm:$0xff]
        %v291 = vld [vmem:[%s283 + $0x70] sm:$0xff]
        %v292 = vld [vmem:[%s274 + $0x1] sm:$0xff]
        %v293 = vld [vmem:[%s274 + $0x11] sm:$0xff]
        %v294 = vld [vmem:[%s274 + $0x21] sm:$0xff]
        %v295 = vld [vmem:[%s274 + $0x31] sm:$0xff]
        %v296 = vld [vmem:[%s274 + $0x41] sm:$0xff]
        %v297 = vld [vmem:[%s274 + $0x51] sm:$0xff]
        %v298 = vld [vmem:[%s274 + $0x61] sm:$0xff]
        %v299 = vld [vmem:[%s274 + $0x71] sm:$0xff]
        %308 = vrot.lane.b32.xlu0 %v232, 4
        %v309 = vpop.permute.xlu0 %308
        %310 = vrot.lane.b32.xlu0 %v233, 4
        %v311 = vpop.permute.xlu0 %310
        %312 = vrot.lane.b32.xlu0 %v234, 4
        %v313 = vpop.permute.xlu0 %312
        %314 = vrot.lane.b32.xlu0 %v235, 4
        %v315 = vpop.permute.xlu0 %314
        %316 = vrot.lane.b32.xlu0 %v236, 4
        %v317 = vpop.permute.xlu0 %316
        %318 = vrot.lane.b32.xlu0 %v237, 4
        %v319 = vpop.permute.xlu0 %318
        %320 = vrot.lane.b32.xlu0 %v238, 4
        %v321 = vpop.permute.xlu0 %320
        %322 = vrot.lane.b32.xlu0 %v239, 4
        %v323 = vpop.permute.xlu0 %322
        %340 = vrot.lane.b32.xlu0 %v240, 8
        %v341 = vpop.permute.xlu0 %340
        %342 = vrot.lane.b32.xlu0 %v241, 8
        %v343 = vpop.permute.xlu0 %342
        %344 = vrot.lane.b32.xlu0 %v242, 8
        %v345 = vpop.permute.xlu0 %344
        %346 = vrot.lane.b32.xlu0 %v243, 8
        %v347 = vpop.permute.xlu0 %346
        %348 = vrot.lane.b32.xlu0 %v244, 8
        %v349 = vpop.permute.xlu0 %348
        %350 = vrot.lane.b32.xlu0 %v245, 8
        %v351 = vpop.permute.xlu0 %350
        %352 = vrot.lane.b32.xlu0 %v246, 8
        %v353 = vpop.permute.xlu0 %352
        %354 = vrot.lane.b32.xlu0 %v247, 8
        %v355 = vpop.permute.xlu0 %354
        %372 = vrot.lane.b32.xlu0 %v249, 12
        %v373 = vpop.permute.xlu0 %372
        %374 = vrot.lane.b32.xlu0 %v250, 12
        %v375 = vpop.permute.xlu0 %374
        %376 = vrot.lane.b32.xlu0 %v251, 12
        %v377 = vpop.permute.xlu0 %376
        %378 = vrot.lane.b32.xlu0 %v252, 12
        %v379 = vpop.permute.xlu0 %378
        %380 = vrot.lane.b32.xlu0 %v253, 12
        %v381 = vpop.permute.xlu0 %380
        %382 = vrot.lane.b32.xlu0 %v254, 12
        %v383 = vpop.permute.xlu0 %382
        %384 = vrot.lane.b32.xlu0 %v255, 12
        %v385 = vpop.permute.xlu0 %384
        %386 = vrot.lane.b32.xlu0 %v256, 12
        %v387 = vpop.permute.xlu0 %386
        %404 = vrot.lane.b32.xlu0 %v258, 16
        %v405 = vpop.permute.xlu0 %404
        %406 = vrot.lane.b32.xlu0 %v259, 16
        %v407 = vpop.permute.xlu0 %406
        %408 = vrot.lane.b32.xlu0 %v260, 16
        %v409 = vpop.permute.xlu0 %408
        %410 = vrot.lane.b32.xlu0 %v261, 16
        %v411 = vpop.permute.xlu0 %410
        %412 = vrot.lane.b32.xlu0 %v262, 16
        %v413 = vpop.permute.xlu0 %412
        %414 = vrot.lane.b32.xlu0 %v263, 16
        %v415 = vpop.permute.xlu0 %414
        %416 = vrot.lane.b32.xlu0 %v264, 16
        %v417 = vpop.permute.xlu0 %416
        %418 = vrot.lane.b32.xlu0 %v265, 16
        %v419 = vpop.permute.xlu0 %418
        %436 = vrot.lane.b32.xlu0 %v266, 20
        %v437 = vpop.permute.xlu0 %436
        %438 = vrot.lane.b32.xlu0 %v267, 20
        %v439 = vpop.permute.xlu0 %438
        %440 = vrot.lane.b32.xlu0 %v268, 20
        %v441 = vpop.permute.xlu0 %440
        %442 = vrot.lane.b32.xlu0 %v269, 20
        %v443 = vpop.permute.xlu0 %442
        %444 = vrot.lane.b32.xlu0 %v270, 20
        %v445 = vpop.permute.xlu0 %444
        %446 = vrot.lane.b32.xlu0 %v271, 20
        %v447 = vpop.permute.xlu0 %446
        %448 = vrot.lane.b32.xlu0 %v272, 20
        %v449 = vpop.permute.xlu0 %448
        %450 = vrot.lane.b32.xlu0 %v273, 20
        %v451 = vpop.permute.xlu0 %450
        %468 = vrot.lane.b32.xlu0 %v275, 24
        %v469 = vpop.permute.xlu0 %468
        %470 = vrot.lane.b32.xlu0 %v276, 24
        %v471 = vpop.permute.xlu0 %470
        %472 = vrot.lane.b32.xlu0 %v277, 24
        %v473 = vpop.permute.xlu0 %472
        %474 = vrot.lane.b32.xlu0 %v278, 24
        %v475 = vpop.permute.xlu0 %474
        %476 = vrot.lane.b32.xlu0 %v279, 24
        %v477 = vpop.permute.xlu0 %476
        %478 = vrot.lane.b32.xlu0 %v280, 24
        %v479 = vpop.permute.xlu0 %478
        %480 = vrot.lane.b32.xlu0 %v281, 24
        %v481 = vpop.permute.xlu0 %480
        %482 = vrot.lane.b32.xlu0 %v282, 24
        %v483 = vpop.permute.xlu0 %482
        %500 = vrot.lane.b32.xlu0 %v284, 28
        %v501 = vpop.permute.xlu0 %500
        %502 = vrot.lane.b32.xlu0 %v285, 28
        %v503 = vpop.permute.xlu0 %502
        %504 = vrot.lane.b32.xlu0 %v286, 28
        %v505 = vpop.permute.xlu0 %504
        %506 = vrot.lane.b32.xlu0 %v287, 28
        %v507 = vpop.permute.xlu0 %506
        %508 = vrot.lane.b32.xlu0 %v288, 28
        %v509 = vpop.permute.xlu0 %508
        %510 = vrot.lane.b32.xlu0 %v289, 28
        %v511 = vpop.permute.xlu0 %510
        %512 = vrot.lane.b32.xlu0 %v290, 28
        %v513 = vpop.permute.xlu0 %512
        %514 = vrot.lane.b32.xlu0 %v291, 28
        %v515 = vpop.permute.xlu0 %514
        %532 = vrot.lane.b32.xlu0 %v292, 32
        %v533 = vpop.permute.xlu0 %532
        %534 = vrot.lane.b32.xlu0 %v293, 32
        %v535 = vpop.permute.xlu0 %534
        %536 = vrot.lane.b32.xlu0 %v294, 32
        %v537 = vpop.permute.xlu0 %536
        %538 = vrot.lane.b32.xlu0 %v295, 32
        %v539 = vpop.permute.xlu0 %538
        %540 = vrot.lane.b32.xlu0 %v296, 32
        %v541 = vpop.permute.xlu0 %540
        %542 = vrot.lane.b32.xlu0 %v297, 32
        %v543 = vpop.permute.xlu0 %542
        %544 = vrot.lane.b32.xlu0 %v298, 32
        %v545 = vpop.permute.xlu0 %544
        %546 = vrot.lane.b32.xlu0 %v299, 32
        %v547 = vpop.permute.xlu0 %546
        %vm556 = vcmask 31744
        %v557 = vsel %vm556, %v223, %v309
        %v558 = vsel %vm556, %v224, %v311
        %v559 = vsel %vm556, %v225, %v313
        %v560 = vsel %vm556, %v226, %v315
        %v561 = vsel %vm556, %v227, %v317
        %v562 = vsel %vm556, %v228, %v319
        %v563 = vsel %vm556, %v229, %v321
        %v564 = vsel %vm556, %v230, %v323
        %vm565 = vcmask 64512
        %v566 = vsel %vm565, %v557, %v341
        %v567 = vsel %vm565, %v558, %v343
        %v568 = vsel %vm565, %v559, %v345
        %v569 = vsel %vm565, %v560, %v347
        %v570 = vsel %vm565, %v561, %v349
        %v571 = vsel %vm565, %v562, %v351
        %v572 = vsel %vm565, %v563, %v353
        %v573 = vsel %vm565, %v564, %v355
        %vm574 = vcmask 97280
        %v575 = vsel %vm574, %v566, %v373
        %v576 = vsel %vm574, %v567, %v375
        %v577 = vsel %vm574, %v568, %v377
        %v578 = vsel %vm574, %v569, %v379
        %v579 = vsel %vm574, %v570, %v381
        %v580 = vsel %vm574, %v571, %v383
        %v581 = vsel %vm574, %v572, %v385
        %v582 = vsel %vm574, %v573, %v387
        %vm583 = vcmask 130048
        %v584 = vsel %vm583, %v575, %v405
        %v585 = vsel %vm583, %v576, %v407
        %v586 = vsel %vm583, %v577, %v409
        %v587 = vsel %vm583, %v578, %v411
        %v588 = vsel %vm583, %v579, %v413
        %v589 = vsel %vm583, %v580, %v415
        %v590 = vsel %vm583, %v581, %v417
        %v591 = vsel %vm583, %v582, %v419
        %vm592 = vcmask 162816
        %v593 = vsel %vm592, %v584, %v437
        %v594 = vsel %vm592, %v585, %v439
        %v595 = vsel %vm592, %v586, %v441
        %v596 = vsel %vm592, %v587, %v443
        %v597 = vsel %vm592, %v588, %v445
        %v598 = vsel %vm592, %v589, %v447
        %v599 = vsel %vm592, %v590, %v449
        %v600 = vsel %vm592, %v591, %v451
        %vm601 = vcmask 195584
        %v602 = vsel %vm601, %v593, %v469
        %v603 = vsel %vm601, %v594, %v471
        %v604 = vsel %vm601, %v595, %v473
        %v605 = vsel %vm601, %v596, %v475
        %v606 = vsel %vm601, %v597, %v477
        %v607 = vsel %vm601, %v598, %v479
        %v608 = vsel %vm601, %v599, %v481
        %v609 = vsel %vm601, %v600, %v483
        %vm610 = vcmask 228352
        %v611 = vsel %vm610, %v602, %v501
        %v612 = vsel %vm610, %v603, %v503
        %v613 = vsel %vm610, %v604, %v505
        %v614 = vsel %vm610, %v605, %v507
        %v615 = vsel %vm610, %v606, %v509
        %v616 = vsel %vm610, %v607, %v511
        %v617 = vsel %vm610, %v608, %v513
        %v618 = vsel %vm610, %v609, %v515
        %vm619 = vcmask 261120
        %v620 = vsel %vm619, %v611, %v533
        %v621 = vsel %vm619, %v612, %v535
        %v622 = vsel %vm619, %v613, %v537
        %v623 = vsel %vm619, %v614, %v539
        %v624 = vsel %vm619, %v615, %v541
        %v625 = vsel %vm619, %v616, %v543
        %v626 = vsel %vm619, %v617, %v545
        %v627 = vsel %vm619, %v618, %v547
        %v628 = vld [vmem:[%s1] sm:$0xff]
        %v629 = vld [vmem:[%s1 + $0x8] sm:$0xff]
        %v630 = vld [vmem:[%s1 + $0x10] sm:$0xff]
        %v631 = vld [vmem:[%s1 + $0x18] sm:$0xff]
        %v632 = vld [vmem:[%s1 + $0x20] sm:$0xf]
        %v633 = vld [vmem:[%s2] sm:$0x1]
        %v635 = vperm.slane %v633, 0
        %vm637 = vcmask 293888
        %v639 = vsel %vm637, %v620, 0
        %v642 = vsel %vm637, %v621, 0
        %v645 = vsel %vm637, %v622, 0
        %v648 = vsel %vm637, %v623, 0
        %v651 = vsel %vm637, %v624, 0
        %v654 = vsel %vm637, %v625, 0
        %v657 = vsel %vm637, %v626, 0
        %v660 = vsel %vm637, %v627, 0
        %vm662 = vcmask 1043456
        %v664 = vsel %vm662, %v632, 0
        %666 = vmatpush.msra.mxu0 0.0
        %667 = vmatpush.msra.mxu0 0.0
        %668 = vmatpush.msra.mxu0 0.0
        %669 = vmatpush.msra.mxu0 0.0
        %670 = vmatpush.msra.mxu0 0.0
        %671 = vmatpush.msra.mxu0 0.0
        %672 = vmatpush.msra.mxu0 0.0
        %673 = vmatpush.msra.mxu0 0.0
        %674 = vmatpush.msra.mxu0 0.0
        %675 = vmatpush.msra.mxu0 0.0
        %676 = vmatpush.msra.mxu0 0.0
        %677 = vmatpush.msra.mxu0 %v664
        %678 = vmatpush.msra.mxu0 %v631
        %679 = vmatpush.msra.mxu0 %v630
        %680 = vmatpush.msra.mxu0 %v629
        %681 = vmatpush.msra.mxu0 %v628
        %682 = vmatmul.f32.gmra.mxu0 %v639
        %v683 = vpop.f32.mrf.mxu0
        %v684 = vadd.f32 %v635, %v683
        %685 = vmatmul.f32.gmra.mxu0 %v642
        %v686 = vpop.f32.mrf.mxu0
        %v687 = vadd.f32 %v635, %v686
        %688 = vmatmul.f32.gmra.mxu0 %v645
        %v689 = vpop.f32.mrf.mxu0
        %v690 = vadd.f32 %v635, %v689
        %691 = vmatmul.f32.gmra.mxu0 %v648
        %v692 = vpop.f32.mrf.mxu0
        %v693 = vadd.f32 %v635, %v692
        %694 = vmatmul.f32.gmra.mxu0 %v651
        %v695 = vpop.f32.mrf.mxu0
        %v696 = vadd.f32 %v635, %v695
        %697 = vmatmul.f32.gmra.mxu0 %v654
        %v698 = vpop.f32.mrf.mxu0
        %v699 = vadd.f32 %v635, %v698
        %700 = vmatmul.f32.gmra.mxu0 %v657
        %v701 = vpop.f32.mrf.mxu0
        %v702 = vadd.f32 %v635, %v701
        %703 = vmatmul.f32.gmra.mxu0 %v660
        %v704 = vpop.f32.mrf.mxu0
        %v705 = vadd.f32 %v635, %v704
        %706 = vdwg.mxu0
        %v707 = vmax.f32 %v684, 0.0
        %v708 = vmax.f32 %v687, 0.0
        %v709 = vmax.f32 %v690, 0.0
        %v710 = vmax.f32 %v693, 0.0
        %v711 = vmax.f32 %v696, 0.0
        %v712 = vmax.f32 %v699, 0.0
        %v713 = vmax.f32 %v702, 0.0
        %v714 = vmax.f32 %v705, 0.0
        %715 = vst.msk [vmem:[#allocation2] sm:$0xff] %vm565, 0.0
        %vm716 = vcmask 58368
        %717 = vst.msk [vmem:[#allocation2 + $0x8] sm:$0x3] %vm716, 0.0
        %718 = vst.msk [vmem:[#allocation2 + $0x10] sm:$0xff] %vm565, 0.0
        %719 = vst.msk [vmem:[#allocation2 + $0x18] sm:$0x3] %vm716, 0.0
        %720 = vst.msk [vmem:[#allocation2 + $0x20] sm:$0xff] %vm565, 0.0
        %721 = vst.msk [vmem:[#allocation2 + $0x28] sm:$0x3] %vm716, 0.0
        %722 = vst.msk [vmem:[#allocation2 + $0x30] sm:$0xff] %vm565, 0.0
        %723 = vst.msk [vmem:[#allocation2 + $0x38] sm:$0x3] %vm716, 0.0
        %724 = vst.msk [vmem:[#allocation2 + $0x40] sm:$0xff] %vm565, 0.0
        %725 = vst.msk [vmem:[#allocation2 + $0x48] sm:$0x3] %vm716, 0.0
        %726 = vst.msk [vmem:[#allocation2 + $0x50] sm:$0xff] %vm565, 0.0
        %727 = vst.msk [vmem:[#allocation2 + $0x58] sm:$0x3] %vm716, 0.0
        %728 = vst.msk [vmem:[#allocation2 + $0x60] sm:$0xff] %vm565, 0.0
        %729 = vst.msk [vmem:[#allocation2 + $0x68] sm:$0x3] %vm716, 0.0
        %730 = vst.msk [vmem:[#allocation2 + $0x70] sm:$0xff] %vm565, 0.0
        %731 = vst.msk [vmem:[#allocation2 + $0x78] sm:$0x3] %vm716, 0.0
        %732 = vst.msk [vmem:[#allocation2 + $0x80] sm:$0xff] %vm565, 0.0
        %733 = vst.msk [vmem:[#allocation2 + $0x88] sm:$0x3] %vm716, 0.0
        %734 = vst.msk [vmem:[#allocation2 + $0x90] sm:$0xff] %vm565, 0.0
        %735 = vst.msk [vmem:[#allocation2 + $0x98] sm:$0x3] %vm716, 0.0
        %s736 = scalar_lea.vmem [#allocation2], 16
        %737 = vst.msk [vmem:[%s736 + $0x1] sm:$0xff] %vm565, %v707
        %738 = vst.msk [vmem:[%s736 + $0x11] sm:$0xff] %vm565, %v708
        %739 = vst.msk [vmem:[%s736 + $0x21] sm:$0xff] %vm565, %v709
        %740 = vst.msk [vmem:[%s736 + $0x31] sm:$0xff] %vm565, %v710
        %741 = vst.msk [vmem:[%s736 + $0x41] sm:$0xff] %vm565, %v711
        %742 = vst.msk [vmem:[%s736 + $0x51] sm:$0xff] %vm565, %v712
        %743 = vst.msk [vmem:[%s736 + $0x61] sm:$0xff] %vm565, %v713
        %744 = vst.msk [vmem:[%s736 + $0x71] sm:$0xff] %vm565, %v714
        %v745 = vld [vmem:[#allocation2] sm:$0xff]
        %v746 = vld [vmem:[#allocation2 + $0x10] sm:$0xff]
        %v747 = vld [vmem:[#allocation2 + $0x20] sm:$0xff]
        %v748 = vld [vmem:[#allocation2 + $0x30] sm:$0xff]
        %v749 = vld [vmem:[#allocation2 + $0x40] sm:$0xff]
        %v750 = vld [vmem:[#allocation2 + $0x50] sm:$0xff]
        %v751 = vld [vmem:[#allocation2 + $0x60] sm:$0xff]
        %v752 = vld [vmem:[#allocation2 + $0x70] sm:$0xff]
        %v753 = vld [vmem:[#allocation2 + $0x1] sm:$0xff]
        %v754 = vld [vmem:[#allocation2 + $0x11] sm:$0xff]
        %v755 = vld [vmem:[#allocation2 + $0x21] sm:$0xff]
        %v756 = vld [vmem:[#allocation2 + $0x31] sm:$0xff]
        %v757 = vld [vmem:[#allocation2 + $0x41] sm:$0xff]
        %v758 = vld [vmem:[#allocation2 + $0x51] sm:$0xff]
        %v759 = vld [vmem:[#allocation2 + $0x61] sm:$0xff]
        %v760 = vld [vmem:[#allocation2 + $0x71] sm:$0xff]
        %v761 = vld [vmem:[#allocation2 + $0x2] sm:$0xff]
        %v762 = vld [vmem:[#allocation2 + $0x12] sm:$0xff]
        %v763 = vld [vmem:[#allocation2 + $0x22] sm:$0xff]
        %v764 = vld [vmem:[#allocation2 + $0x32] sm:$0xff]
        %v765 = vld [vmem:[#allocation2 + $0x42] sm:$0xff]
        %v766 = vld [vmem:[#allocation2 + $0x52] sm:$0xff]
        %v767 = vld [vmem:[#allocation2 + $0x62] sm:$0xff]
        %v768 = vld [vmem:[#allocation2 + $0x72] sm:$0xff]
        %v769 = vld [vmem:[%s736] sm:$0xff]
        %v770 = vld [vmem:[%s736 + $0x10] sm:$0xff]
        %v771 = vld [vmem:[%s736 + $0x20] sm:$0xff]
        %v772 = vld [vmem:[%s736 + $0x30] sm:$0xff]
        %v773 = vld [vmem:[%s736 + $0x40] sm:$0xff]
        %v774 = vld [vmem:[%s736 + $0x50] sm:$0xff]
        %v775 = vld [vmem:[%s736 + $0x60] sm:$0xff]
        %v776 = vld [vmem:[%s736 + $0x70] sm:$0xff]
        %v777 = vld [vmem:[%s736 + $0x1] sm:$0xff]
        %v778 = vld [vmem:[%s736 + $0x11] sm:$0xff]
        %v779 = vld [vmem:[%s736 + $0x21] sm:$0xff]
        %v780 = vld [vmem:[%s736 + $0x31] sm:$0xff]
        %v781 = vld [vmem:[%s736 + $0x41] sm:$0xff]
        %v782 = vld [vmem:[%s736 + $0x51] sm:$0xff]
        %v783 = vld [vmem:[%s736 + $0x61] sm:$0xff]
        %v784 = vld [vmem:[%s736 + $0x71] sm:$0xff]
        %v785 = vld [vmem:[%s736 + $0x2] sm:$0xff]
        %v786 = vld [vmem:[%s736 + $0x12] sm:$0xff]
        %v787 = vld [vmem:[%s736 + $0x22] sm:$0xff]
        %v788 = vld [vmem:[%s736 + $0x32] sm:$0xff]
        %v789 = vld [vmem:[%s736 + $0x42] sm:$0xff]
        %v790 = vld [vmem:[%s736 + $0x52] sm:$0xff]
        %v791 = vld [vmem:[%s736 + $0x62] sm:$0xff]
        %v792 = vld [vmem:[%s736 + $0x72] sm:$0xff]
        %s793 = scalar_lea.vmem [#allocation2], 32
        %v794 = vld [vmem:[%s793] sm:$0xff]
        %v795 = vld [vmem:[%s793 + $0x10] sm:$0xff]
        %v796 = vld [vmem:[%s793 + $0x20] sm:$0xff]
        %v797 = vld [vmem:[%s793 + $0x30] sm:$0xff]
        %v798 = vld [vmem:[%s793 + $0x40] sm:$0xff]
        %v799 = vld [vmem:[%s793 + $0x50] sm:$0xff]
        %v800 = vld [vmem:[%s793 + $0x60] sm:$0xff]
        %v801 = vld [vmem:[%s793 + $0x70] sm:$0xff]
        %v802 = vld [vmem:[%s793 + $0x1] sm:$0xff]
        %v803 = vld [vmem:[%s793 + $0x11] sm:$0xff]
        %v804 = vld [vmem:[%s793 + $0x21] sm:$0xff]
        %v805 = vld [vmem:[%s793 + $0x31] sm:$0xff]
        %v806 = vld [vmem:[%s793 + $0x41] sm:$0xff]
        %v807 = vld [vmem:[%s793 + $0x51] sm:$0xff]
        %v808 = vld [vmem:[%s793 + $0x61] sm:$0xff]
        %v809 = vld [vmem:[%s793 + $0x71] sm:$0xff]
        %v810 = vld [vmem:[%s793 + $0x2] sm:$0xff]
        %v811 = vld [vmem:[%s793 + $0x12] sm:$0xff]
        %v812 = vld [vmem:[%s793 + $0x22] sm:$0xff]
        %v813 = vld [vmem:[%s793 + $0x32] sm:$0xff]
        %v814 = vld [vmem:[%s793 + $0x42] sm:$0xff]
        %v815 = vld [vmem:[%s793 + $0x52] sm:$0xff]
        %v816 = vld [vmem:[%s793 + $0x62] sm:$0xff]
        %v817 = vld [vmem:[%s793 + $0x72] sm:$0xff]
        %826 = vrot.lane.b32.xlu0 %v753, 8
        %v827 = vpop.permute.xlu0 %826
        %828 = vrot.lane.b32.xlu0 %v754, 8
        %v829 = vpop.permute.xlu0 %828
        %830 = vrot.lane.b32.xlu0 %v755, 8
        %v831 = vpop.permute.xlu0 %830
        %832 = vrot.lane.b32.xlu0 %v756, 8
        %v833 = vpop.permute.xlu0 %832
        %834 = vrot.lane.b32.xlu0 %v757, 8
        %v835 = vpop.permute.xlu0 %834
        %836 = vrot.lane.b32.xlu0 %v758, 8
        %v837 = vpop.permute.xlu0 %836
        %838 = vrot.lane.b32.xlu0 %v759, 8
        %v839 = vpop.permute.xlu0 %838
        %840 = vrot.lane.b32.xlu0 %v760, 8
        %v841 = vpop.permute.xlu0 %840
        %858 = vrot.lane.b32.xlu0 %v761, 16
        %v859 = vpop.permute.xlu0 %858
        %860 = vrot.lane.b32.xlu0 %v762, 16
        %v861 = vpop.permute.xlu0 %860
        %862 = vrot.lane.b32.xlu0 %v763, 16
        %v863 = vpop.permute.xlu0 %862
        %864 = vrot.lane.b32.xlu0 %v764, 16
        %v865 = vpop.permute.xlu0 %864
        %866 = vrot.lane.b32.xlu0 %v765, 16
        %v867 = vpop.permute.xlu0 %866
        %868 = vrot.lane.b32.xlu0 %v766, 16
        %v869 = vpop.permute.xlu0 %868
        %870 = vrot.lane.b32.xlu0 %v767, 16
        %v871 = vpop.permute.xlu0 %870
        %872 = vrot.lane.b32.xlu0 %v768, 16
        %v873 = vpop.permute.xlu0 %872
        %890 = vrot.lane.b32.xlu0 %v769, 24
        %v891 = vpop.permute.xlu0 %890
        %892 = vrot.lane.b32.xlu0 %v770, 24
        %v893 = vpop.permute.xlu0 %892
        %894 = vrot.lane.b32.xlu0 %v771, 24
        %v895 = vpop.permute.xlu0 %894
        %896 = vrot.lane.b32.xlu0 %v772, 24
        %v897 = vpop.permute.xlu0 %896
        %898 = vrot.lane.b32.xlu0 %v773, 24
        %v899 = vpop.permute.xlu0 %898
        %900 = vrot.lane.b32.xlu0 %v774, 24
        %v901 = vpop.permute.xlu0 %900
        %902 = vrot.lane.b32.xlu0 %v775, 24
        %v903 = vpop.permute.xlu0 %902
        %904 = vrot.lane.b32.xlu0 %v776, 24
        %v905 = vpop.permute.xlu0 %904
        %922 = vrot.lane.b32.xlu0 %v777, 32
        %v923 = vpop.permute.xlu0 %922
        %924 = vrot.lane.b32.xlu0 %v778, 32
        %v925 = vpop.permute.xlu0 %924
        %926 = vrot.lane.b32.xlu0 %v779, 32
        %v927 = vpop.permute.xlu0 %926
        %928 = vrot.lane.b32.xlu0 %v780, 32
        %v929 = vpop.permute.xlu0 %928
        %930 = vrot.lane.b32.xlu0 %v781, 32
        %v931 = vpop.permute.xlu0 %930
        %932 = vrot.lane.b32.xlu0 %v782, 32
        %v933 = vpop.permute.xlu0 %932
        %934 = vrot.lane.b32.xlu0 %v783, 32
        %v935 = vpop.permute.xlu0 %934
        %936 = vrot.lane.b32.xlu0 %v784, 32
        %v937 = vpop.permute.xlu0 %936
        %954 = vrot.lane.b32.xlu0 %v785, 40
        %v955 = vpop.permute.xlu0 %954
        %956 = vrot.lane.b32.xlu0 %v786, 40
        %v957 = vpop.permute.xlu0 %956
        %958 = vrot.lane.b32.xlu0 %v787, 40
        %v959 = vpop.permute.xlu0 %958
        %960 = vrot.lane.b32.xlu0 %v788, 40
        %v961 = vpop.permute.xlu0 %960
        %962 = vrot.lane.b32.xlu0 %v789, 40
        %v963 = vpop.permute.xlu0 %962
        %964 = vrot.lane.b32.xlu0 %v790, 40
        %v965 = vpop.permute.xlu0 %964
        %966 = vrot.lane.b32.xlu0 %v791, 40
        %v967 = vpop.permute.xlu0 %966
        %968 = vrot.lane.b32.xlu0 %v792, 40
        %v969 = vpop.permute.xlu0 %968
        %986 = vrot.lane.b32.xlu0 %v794, 48
        %v987 = vpop.permute.xlu0 %986
        %988 = vrot.lane.b32.xlu0 %v795, 48
        %v989 = vpop.permute.xlu0 %988
        %990 = vrot.lane.b32.xlu0 %v796, 48
        %v991 = vpop.permute.xlu0 %990
        %992 = vrot.lane.b32.xlu0 %v797, 48
        %v993 = vpop.permute.xlu0 %992
        %994 = vrot.lane.b32.xlu0 %v798, 48
        %v995 = vpop.permute.xlu0 %994
        %996 = vrot.lane.b32.xlu0 %v799, 48
        %v997 = vpop.permute.xlu0 %996
        %998 = vrot.lane.b32.xlu0 %v800, 48
        %v999 = vpop.permute.xlu0 %998
        %1000 = vrot.lane.b32.xlu0 %v801, 48
        %v1001 = vpop.permute.xlu0 %1000
        %1018 = vrot.lane.b32.xlu0 %v802, 56
        %v1019 = vpop.permute.xlu0 %1018
        %1020 = vrot.lane.b32.xlu0 %v803, 56
        %v1021 = vpop.permute.xlu0 %1020
        %1022 = vrot.lane.b32.xlu0 %v804, 56
        %v1023 = vpop.permute.xlu0 %1022
        %1024 = vrot.lane.b32.xlu0 %v805, 56
        %v1025 = vpop.permute.xlu0 %1024
        %1026 = vrot.lane.b32.xlu0 %v806, 56
        %v1027 = vpop.permute.xlu0 %1026
        %1028 = vrot.lane.b32.xlu0 %v807, 56
        %v1029 = vpop.permute.xlu0 %1028
        %1030 = vrot.lane.b32.xlu0 %v808, 56
        %v1031 = vpop.permute.xlu0 %1030
        %1032 = vrot.lane.b32.xlu0 %v809, 56
        %v1033 = vpop.permute.xlu0 %1032
        %1050 = vrot.lane.b32.xlu0 %v810, 64
        %v1051 = vpop.permute.xlu0 %1050
        %1052 = vrot.lane.b32.xlu0 %v811, 64
        %v1053 = vpop.permute.xlu0 %1052
        %1054 = vrot.lane.b32.xlu0 %v812, 64
        %v1055 = vpop.permute.xlu0 %1054
        %1056 = vrot.lane.b32.xlu0 %v813, 64
        %v1057 = vpop.permute.xlu0 %1056
        %1058 = vrot.lane.b32.xlu0 %v814, 64
        %v1059 = vpop.permute.xlu0 %1058
        %1060 = vrot.lane.b32.xlu0 %v815, 64
        %v1061 = vpop.permute.xlu0 %1060
        %1062 = vrot.lane.b32.xlu0 %v816, 64
        %v1063 = vpop.permute.xlu0 %1062
        %1064 = vrot.lane.b32.xlu0 %v817, 64
        %v1065 = vpop.permute.xlu0 %1064
        %v1074 = vsel %vm565, %v745, %v827
        %v1075 = vsel %vm565, %v746, %v829
        %v1076 = vsel %vm565, %v747, %v831
        %v1077 = vsel %vm565, %v748, %v833
        %v1078 = vsel %vm565, %v749, %v835
        %v1079 = vsel %vm565, %v750, %v837
        %v1080 = vsel %vm565, %v751, %v839
        %v1081 = vsel %vm565, %v752, %v841
        %v1082 = vsel %vm583, %v1074, %v859
        %v1083 = vsel %vm583, %v1075, %v861
        %v1084 = vsel %vm583, %v1076, %v863
        %v1085 = vsel %vm583, %v1077, %v865
        %v1086 = vsel %vm583, %v1078, %v867
        %v1087 = vsel %vm583, %v1079, %v869
        %v1088 = vsel %vm583, %v1080, %v871
        %v1089 = vsel %vm583, %v1081, %v873
        %v1090 = vsel %vm601, %v1082, %v891
        %v1091 = vsel %vm601, %v1083, %v893
        %v1092 = vsel %vm601, %v1084, %v895
        %v1093 = vsel %vm601, %v1085, %v897
        %v1094 = vsel %vm601, %v1086, %v899
        %v1095 = vsel %vm601, %v1087, %v901
        %v1096 = vsel %vm601, %v1088, %v903
        %v1097 = vsel %vm601, %v1089, %v905
        %v1098 = vsel %vm619, %v1090, %v923
        %v1099 = vsel %vm619, %v1091, %v925
        %v1100 = vsel %vm619, %v1092, %v927
        %v1101 = vsel %vm619, %v1093, %v929
        %v1102 = vsel %vm619, %v1094, %v931
        %v1103 = vsel %vm619, %v1095, %v933
        %v1104 = vsel %vm619, %v1096, %v935
        %v1105 = vsel %vm619, %v1097, %v937
        %vm1106 = vcmask 326656
        %v1107 = vsel %vm1106, %v1098, %v955
        %v1108 = vsel %vm1106, %v1099, %v957
        %v1109 = vsel %vm1106, %v1100, %v959
        %v1110 = vsel %vm1106, %v1101, %v961
        %v1111 = vsel %vm1106, %v1102, %v963
        %v1112 = vsel %vm1106, %v1103, %v965
        %v1113 = vsel %vm1106, %v1104, %v967
        %v1114 = vsel %vm1106, %v1105, %v969
        %vm1115 = vcmask 392192
        %v1116 = vsel %vm1115, %v1107, %v987
        %v1117 = vsel %vm1115, %v1108, %v989
        %v1118 = vsel %vm1115, %v1109, %v991
        %v1119 = vsel %vm1115, %v1110, %v993
        %v1120 = vsel %vm1115, %v1111, %v995
        %v1121 = vsel %vm1115, %v1112, %v997
        %v1122 = vsel %vm1115, %v1113, %v999
        %v1123 = vsel %vm1115, %v1114, %v1001
        %vm1124 = vcmask 457728
        %v1125 = vsel %vm1124, %v1116, %v1019
        %v1126 = vsel %vm1124, %v1117, %v1021
        %v1127 = vsel %vm1124, %v1118, %v1023
        %v1128 = vsel %vm1124, %v1119, %v1025
        %v1129 = vsel %vm1124, %v1120, %v1027
        %v1130 = vsel %vm1124, %v1121, %v1029
        %v1131 = vsel %vm1124, %v1122, %v1031
        %v1132 = vsel %vm1124, %v1123, %v1033
        %vm1133 = vcmask 523264
        %v1134 = vsel %vm1133, %v1125, %v1051
        %v1135 = vsel %vm1133, %v1126, %v1053
        %v1136 = vsel %vm1133, %v1127, %v1055
        %v1137 = vsel %vm1133, %v1128, %v1057
        %v1138 = vsel %vm1133, %v1129, %v1059
        %v1139 = vsel %vm1133, %v1130, %v1061
        %v1140 = vsel %vm1133, %v1131, %v1063
        %v1141 = vsel %vm1133, %v1132, %v1065
        %v1142 = vld [vmem:[%s3] sm:$0xff]
        %v1143 = vld [vmem:[%s3 + $0x8] sm:$0xff]
        %v1144 = vld [vmem:[%s3 + $0x10] sm:$0xff]
        %v1145 = vld [vmem:[%s3 + $0x18] sm:$0xff]
        %v1146 = vld [vmem:[%s3 + $0x20] sm:$0xff]
        %v1147 = vld [vmem:[%s3 + $0x28] sm:$0xff]
        %v1148 = vld [vmem:[%s3 + $0x30] sm:$0xff]
        %v1149 = vld [vmem:[%s3 + $0x38] sm:$0xff]
        %v1150 = vld [vmem:[%s3 + $0x40] sm:$0xff]
        %v1151 = vld [vmem:[%s4] sm:$0x1]
        %v1153 = vperm.slane %v1151, 0
        %vm1155 = vcmask 588800
        %v1157 = vsel %vm1155, %v1134, 0
        %v1160 = vsel %vm1155, %v1135, 0
        %v1163 = vsel %vm1155, %v1136, 0
        %v1166 = vsel %vm1155, %v1137, 0
        %v1169 = vsel %vm1155, %v1138, 0
        %v1172 = vsel %vm1155, %v1139, 0
        %v1175 = vsel %vm1155, %v1140, 0
        %v1178 = vsel %vm1155, %v1141, 0
        %1180 = vmatpush.msra.mxu0 0.0
        %1181 = vmatpush.msra.mxu0 0.0
        %1182 = vmatpush.msra.mxu0 0.0
        %1183 = vmatpush.msra.mxu0 0.0
        %1184 = vmatpush.msra.mxu0 0.0
        %1185 = vmatpush.msra.mxu0 0.0
        %1186 = vmatpush.msra.mxu0 0.0
        %1187 = vmatpush.msra.mxu0 %v1150
        %1188 = vmatpush.msra.mxu0 %v1149
        %1189 = vmatpush.msra.mxu0 %v1148
        %1190 = vmatpush.msra.mxu0 %v1147
        %1191 = vmatpush.msra.mxu0 %v1146
        %1192 = vmatpush.msra.mxu0 %v1145
        %1193 = vmatpush.msra.mxu0 %v1144
        %1194 = vmatpush.msra.mxu0 %v1143
        %1195 = vmatpush.msra.mxu0 %v1142
        %1196 = vmatmul.f32.gmra.mxu0 %v1157
        %v1197 = vpop.f32.mrf.mxu0
        %v1198 = vadd.f32 %v1153, %v1197
        %1199 = vmatmul.f32.gmra.mxu0 %v1160
        %v1200 = vpop.f32.mrf.mxu0
        %v1201 = vadd.f32 %v1153, %v1200
        %1202 = vmatmul.f32.gmra.mxu0 %v1163
        %v1203 = vpop.f32.mrf.mxu0
        %v1204 = vadd.f32 %v1153, %v1203
        %1205 = vmatmul.f32.gmra.mxu0 %v1166
        %v1206 = vpop.f32.mrf.mxu0
        %v1207 = vadd.f32 %v1153, %v1206
        %1208 = vmatmul.f32.gmra.mxu0 %v1169
        %v1209 = vpop.f32.mrf.mxu0
        %v1210 = vadd.f32 %v1153, %v1209
        %1211 = vmatmul.f32.gmra.mxu0 %v1172
        %v1212 = vpop.f32.mrf.mxu0
        %v1213 = vadd.f32 %v1153, %v1212
        %1214 = vmatmul.f32.gmra.mxu0 %v1175
        %v1215 = vpop.f32.mrf.mxu0
        %v1216 = vadd.f32 %v1153, %v1215
        %1217 = vmatmul.f32.gmra.mxu0 %v1178
        %v1218 = vpop.f32.mrf.mxu0
        %v1219 = vadd.f32 %v1153, %v1218
        %1220 = vdwg.mxu0
        %v1221 = vld [vmem:[%s257] sm:$0xff]
        %v1222 = vld [vmem:[%s257 + $0x10] sm:$0xff]
        %v1223 = vld [vmem:[%s257 + $0x20] sm:$0xff]
        %v1224 = vld [vmem:[%s257 + $0x30] sm:$0xff]
        %v1225 = vld [vmem:[%s257 + $0x40] sm:$0xff]
        %v1226 = vld [vmem:[%s257 + $0x50] sm:$0xff]
        %v1227 = vld [vmem:[%s257 + $0x60] sm:$0xff]
        %v1228 = vld [vmem:[%s257 + $0x70] sm:$0xff]
        %1237 = vrot.lane.b32.xlu0 %v1221, 2
        %v1238 = vpop.permute.xlu0 %1237
        %1239 = vrot.lane.b32.xlu0 %v1222, 2
        %v1240 = vpop.permute.xlu0 %1239
        %1241 = vrot.lane.b32.xlu0 %v1223, 2
        %v1242 = vpop.permute.xlu0 %1241
        %1243 = vrot.lane.b32.xlu0 %v1224, 2
        %v1244 = vpop.permute.xlu0 %1243
        %1245 = vrot.lane.b32.xlu0 %v1225, 2
        %v1246 = vpop.permute.xlu0 %1245
        %1247 = vrot.lane.b32.xlu0 %v1226, 2
        %v1248 = vpop.permute.xlu0 %1247
        %1249 = vrot.lane.b32.xlu0 %v1227, 2
        %v1250 = vpop.permute.xlu0 %1249
        %1251 = vrot.lane.b32.xlu0 %v1228, 2
        %v1252 = vpop.permute.xlu0 %1251
        %vm1261 = vcmask 15360
        %v1262 = vsel %vm1261, 0.0, %v1238
        %v1263 = vsel %vm1261, 0.0, %v1240
        %v1264 = vsel %vm1261, 0.0, %v1242
        %v1265 = vsel %vm1261, 0.0, %v1244
        %v1266 = vsel %vm1261, 0.0, %v1246
        %v1267 = vsel %vm1261, 0.0, %v1248
        %v1268 = vsel %vm1261, 0.0, %v1250
        %v1269 = vsel %vm1261, 0.0, %v1252
        %vm1270 = vcmask 48128
        %v1271 = vsel %vm1270, %v1262, 0.0
        %v1272 = vsel %vm1270, %v1263, 0.0
        %v1273 = vsel %vm1270, %v1264, 0.0
        %v1274 = vsel %vm1270, %v1265, 0.0
        %v1275 = vsel %vm1270, %v1266, 0.0
        %v1276 = vsel %vm1270, %v1267, 0.0
        %v1277 = vsel %vm1270, %v1268, 0.0
        %v1278 = vsel %vm1270, %v1269, 0.0
        %v1279 = vadd.f32 %v1198, %v1271
        %v1280 = vadd.f32 %v1201, %v1272
        %v1281 = vadd.f32 %v1204, %v1273
        %v1282 = vadd.f32 %v1207, %v1274
        %v1283 = vadd.f32 %v1210, %v1275
        %v1284 = vadd.f32 %v1213, %v1276
        %v1285 = vadd.f32 %v1216, %v1277
        %v1286 = vadd.f32 %v1219, %v1278
        %v1287 = vmax.f32 %v1279, 0.0
        %v1288 = vmax.f32 %v1280, 0.0
        %v1289 = vmax.f32 %v1281, 0.0
        %v1290 = vmax.f32 %v1282, 0.0
        %v1291 = vmax.f32 %v1283, 0.0
        %v1292 = vmax.f32 %v1284, 0.0
        %v1293 = vmax.f32 %v1285, 0.0
        %v1294 = vmax.f32 %v1286, 0.0
        %1295 = vxpose.xlu0.b32.start [1/16] %v1287, 128
        %1296 = vxpose.xlu0.b32.cont [2/16] %v1288, 128
        %1297 = vxpose.xlu0.b32.cont [3/16] %v1289, 128
        %1298 = vxpose.xlu0.b32.cont [4/16] %v1290, 128
        %1299 = vxpose.xlu0.b32.cont [5/16] %v1291, 128
        %1300 = vxpose.xlu0.b32.cont [6/16] %v1292, 128
        %1301 = vxpose.xlu0.b32.cont [7/16] %v1293, 128
        %1302 = vxpose.xlu0.b32.cont [8/16] %v1294, 128
        %1303 = vxpose.xlu0.b32.cont [9/16] 0.0, 128
        %1304 = vxpose.xlu0.b32.cont [10/16] 0.0, 128
        %1305 = vxpose.xlu0.b32.cont [11/16] 0.0, 128
        %1306 = vxpose.xlu0.b32.cont [12/16] 0.0, 128
        %1307 = vxpose.xlu0.b32.cont [13/16] 0.0, 128
        %1308 = vxpose.xlu0.b32.cont [14/16] 0.0, 128
        %1309 = vxpose.xlu0.b32.cont [15/16] 0.0, 128
        %1310 = vxpose.xlu0.b32.end [16/16] 0.0, 128
        %v1311 = vpop.trf.xlu0
        %v1312 = vpop.trf.xlu0
        %v1313 = vpop.trf.xlu0
        %v1314 = vpop.trf.xlu0
        %v1315 = vpop.trf.xlu0
        %v1316 = vpop.trf.xlu0
        %v1317 = vpop.trf.xlu0
        %v1318 = vpop.trf.xlu0
        %v1319 = vpop.trf.xlu0
        %v1320 = vpop.trf.xlu0
        %v1321 = vpop.trf.xlu0
        %v1322 = vpop.trf.xlu0
        %v1323 = vpop.trf.xlu0
        %v1324 = vpop.trf.xlu0
        %v1325 = vpop.trf.xlu0
        %v1326 = vpop.trf.xlu0
        %v1327 = vsel %vm1133, %v1311, 0.0
        %1328 = vst [vmem:[%s217] sm:$0xff] %v1327
        %s1329 = sand.u32 %s137, 1
        %s1330 = scalar_lea.sflag [#allocation4], %s1329
        %s1331 = sand.u32 %s137, 1
        %s1332 = smul.addr %s1331, 8
        %s1333 = scalar_lea.vmem [#allocation3], %s1332
        // Predicated region
        $region41: #{tpu_custom_call.1} parent=39 // pred_check
          %p1334 = pneg %p147
        $region42: #{tpu_custom_call.1} parent=39 // pred_check_branch
          %1336 = sbr.rel (%p1334) target = $region44
        $region43: #{tpu_custom_call.1} parent=39 // pred_region
          %1338 = vsyncadd %s1330, 0
          %s1339 = smul.addr %s19, 8
          %s1340 = scalar_lea.hbm %s5, %s1339
          %s1342 = sshll.u32 %s1333, 4
          %s1343 = int_to_ptr.vmem [resolvable:$true] %s1342
          %s1344 = sshll.u32 %s1340, 4
          %s1345 = int_to_ptr.hbm [resolvable:$true] %s1344
          %1347 = dma.vmem_to_hbm [thread:$0]  %s1343, 128, %s1345, %s1330
        $region44: #{tpu_custom_call.1} parent=39 // pred_fallthru
          _
      $region40: #{tpu_custom_call.1} parent=5 // pred_fallthru
        _
      %p1348 = scmp.le.s32.totalorder 2, %s14
      // Predicated region
      $region45: #{tpu_custom_call.1} parent=5 // pred_check
        %p1349 = pneg %p1348
      $region46: #{tpu_custom_call.1} parent=5 // pred_check_branch
        %1351 = sbr.rel (%p1349) target = $region48
      $region47: #{tpu_custom_call.1} parent=5 // pred_region
        %s1352 = ssub.s32 %s14, 2
        // Predicated region
        $region49: #{tpu_custom_call.1} parent=47 // pred_check
          %p1353 = pneg %p153
        $region50: #{tpu_custom_call.1} parent=47 // pred_check_branch
          %1355 = sbr.rel (%p1353) target = $region52
        $region51: #{tpu_custom_call.1} parent=47 // pred_region
          %s1356 = sand.u32 %s138, 1
          %s1357 = scalar_lea.sflag [#allocation4], %s1356
          %s1358 = sand.u32 %s138, 1
          %s1359 = smul.addr %s1358, 8
          %s1360 = scalar_lea.vmem [#allocation3], %s1359
          %1362 = dma.done %s1357, 128
        $region52: #{tpu_custom_call.1} parent=47 // pred_fallthru
          _
      $region48: #{tpu_custom_call.1} parent=5 // pred_fallthru
        _
    $region6: #{tpu_custom_call.1} parent=1 // loop_footer
      %s18 = sadd.s32 1, %s14
    $region7: #{tpu_custom_call.1} parent=1 // loop_footer_branch
      %13 = sbr.rel target = $region3
    $region8: #{tpu_custom_call.1} parent=1 // loop_exit
      _
    %1363 = vsyncpa [#allocation4], 1
    %s1364 = scalar_lea.sflag [#allocation4], 1
    %1365 = vsyncpa %s1364, 1

</llo_original>
